<compile_context>
chip_gen: v5e
topology: v5e:2x2
jax: 0.10.0
libtpu: 0.0.40
codegen_flags: <defaults>
</compile_context>

<pallas_src>
import functools

import jax
import jax.numpy as jnp
import numpy as np
from jax.experimental import pallas as pl
from jax.experimental.pallas import tpu as pltpu


_FMA_K_MAX = 8   # contractions with K <= this run as VPU FMAs, not MXU dots


# ------------------------------ Fused kernel ------------------------------- #

def _mm(w, h):
    """w @ h: MXU dot for real contractions, VPU outer-product FMAs for tiny K."""
    k = w.shape[1]
    if k <= _FMA_K_MAX:
        # K is tiny (e.g. 3 coordinates): a few broadcast FMAs on the VPU are
        # cheaper than an MXU push + result pop on the critical path.
        hf = h.astype(jnp.float32)
        acc = w[:, 0:1].astype(jnp.float32) * hf[0:1, :]
        for j in range(1, k):
            acc = acc + w[:, j:j + 1].astype(jnp.float32) * hf[j:j + 1, :]
        return acc
    hm = h if h.dtype == w.dtype else h.astype(w.dtype)   # bf16 on v6e/v7x
    return jnp.dot(w, hm, preferred_element_type=jnp.float32)


def _siren_fused_kernel(*refs, layer_kinds, num_param_refs):
    """Whole SIREN stack for one lane-major row tile.

    refs = (xT_ref, <per-layer weight/bias refs...>, o_ref)
      xT_ref : (dim_in , tm)   -- tm points on the 128-lane axis
      o_ref  : (dim_out, tm)
    w0 is already folded into weights/biases, so a hidden layer is just
    sin(W_s @ h + b_s).  Skip layers own 3 param refs (W_h, W_in, b).
    """
    xT_ref = refs[0]
    param_refs = refs[1:1 + num_param_refs]
    o_ref = refs[1 + num_param_refs]

    xT = xT_ref[...]                       # (dim_in, tm) f32, reused by skips
    h = xT
    idx = 0
    for kind in layer_kinds:
        if kind == "skip":
            # concat((h, x)) @ W^T == h @ W_h^T + x @ W_in^T (split matmul)
            w_h = param_refs[idx][...]
            w_in = param_refs[idx + 1][...]
            b = param_refs[idx + 2][...]
            idx += 3
            y = _mm(w_h, h) + _mm(w_in, xT) + b
        else:
            w = param_refs[idx][...]
            b = param_refs[idx + 1][...]
            idx += 2
            y = _mm(w, h) + b
        if kind == "last":
            o_ref[...] = y.astype(o_ref.dtype)     # identity activation
        else:
            h = jnp.sin(y)                         # Sine(w0); w0 pre-folded


# ------------------------------ Host wrapper -------------------------------- #

def _round_up(x, m):
    return ((x + m - 1) // m) * m


def _default_hidden_dtype():
    """bf16 hidden-layer matmuls on v6e/v7x (bf16-native MXU); f32 elsewhere."""
    try:
        kind = jax.devices()[0].device_kind.lower()
    except Exception:
        return jnp.float32
    if "v6" in kind or "v7" in kind:
        return jnp.bfloat16
    return jnp.float32


def siren_net_forward(x, params, last, skip_flags, *, tm=2048,
                      hidden_dtype=None, feature_major_io=False):
    """Pallas-backed SirenNet forward.

    x: [..., dim_in] point-major, or [dim_in, N] if feature_major_io=True
    (the latter drops both wrapper-side HBM transposes).
    """
    if hidden_dtype is None:
        hidden_dtype = _default_hidden_dtype()
    f32 = jnp.float32
    dim_out = last["w"].shape[0]

    if feature_major_io:
        dim_in, n = x.shape
        lead_shape = None
        x2T = x.astype(f32)
    else:
        lead_shape = x.shape[:-1]
        dim_in = x.shape[-1]
        n = int(np.prod(lead_shape)) if lead_shape else 1
        x2T = x.reshape(n, dim_in).T.astype(f32)      # one HBM transpose pass

    # Tiling: large lane tiles amortize the ~0.35us/step overhead; >=2 grid
    # steps when possible (both v7x TCs); tiles balanced so padding stays low.
    n128 = _round_up(max(n, 1), 128)
    min_steps = 2 if n128 >= 256 else 1
    grid_n = max(pl.cdiv(n128, tm), min_steps)
    tm_eff = _round_up(pl.cdiv(max(n, 1), grid_n), 128)
    n_pad = grid_n * tm_eff
    if n_pad != n:
        x2T = jnp.pad(x2T, ((0, 0), (0, n_pad - n)))

    # Flatten parameters into a positional arg list + matching BlockSpecs.
    args = [x2T]
    in_specs = [pl.BlockSpec((dim_in, tm_eff), lambda i: (0, i))]
    layer_kinds = []
    flops = 0
    transcendentals = 0
    param_bytes = 0

    def add_param(a):
        args.append(a)
        in_specs.append(pl.BlockSpec(a.shape, lambda i: (0, 0)))
        return int(a.size * a.dtype.itemsize)

    for k, p in enumerate(params):
        w0 = float(p["w0"])
        w = p["w"].astype(f32) * w0                    # fold Sine's w0 into W
        b = (p["b"].astype(f32) * w0).reshape(-1, 1)   # ... and into b
        d_out_k, d_in_k = w.shape
        if skip_flags[k]:
            d_prev = d_in_k - dim_in
            w_h = w[:, :d_prev]
            w_in = w[:, d_prev:]                       # acts on raw coords (f32)
            if w_h.shape[1] > _FMA_K_MAX:
                w_h = w_h.astype(hidden_dtype)         # MXU path -> bf16 v6e/v7x
            param_bytes += add_param(w_h)
            param_bytes += add_param(w_in)
            param_bytes += add_param(b)
            layer_kinds.append("skip")
        else:
            if d_in_k > _FMA_K_MAX:
                w = w.astype(hidden_dtype)
            param_bytes += add_param(w)
            param_bytes += add_param(b)
            layer_kinds.append("plain")
        flops += 2 * n_pad * d_in_k * d_out_k
        transcendentals += n_pad * d_out_k

    w_last = last["w"].astype(f32)
    if w_last.shape[1] > _FMA_K_MAX:
        w_last = w_last.astype(hidden_dtype)
    b_last = last["b"].astype(f32).reshape(-1, 1)
    param_bytes += add_param(w_last)
    param_bytes += add_param(b_last)
    layer_kinds.append("last")
    flops += 2 * n_pad * last["w"].shape[1] * dim_out

    kernel = functools.partial(
        _siren_fused_kernel,
        layer_kinds=tuple(layer_kinds),
        num_param_refs=len(args) - 1,
    )

    # Kernel I/O bytes; point-major callers also pay read+write per transpose.
    io_mult = 1 if feature_major_io else 3
    bytes_accessed = io_mult * 4 * n_pad * (dim_in + dim_out) + param_bytes

    out_T = pl.pallas_call(
        kernel,
        out_shape=jax.ShapeDtypeStruct((dim_out, n_pad), x.dtype),
        grid_spec=pltpu.PrefetchScalarGridSpec(
            num_scalar_prefetch=0,
            grid=(grid_n,),
            in_specs=in_specs,
            out_specs=pl.BlockSpec((dim_out, tm_eff), lambda i: (0, i)),
        ),
        compiler_params=pltpu.CompilerParams(
            dimension_semantics=("parallel",),      # shard tiles across v7x TCs
            vmem_limit_bytes=32 * 1024 * 1024,
        ),
        cost_estimate=pl.CostEstimate(
            flops=flops,
            transcendentals=transcendentals,
            bytes_accessed=bytes_accessed,
        ),
    )(*args)

    if feature_major_io:
        return out_T[:, :n]
    out = out_T[:, :n].T                 # fused slice+transpose, single pass
    return out.reshape(*lead_shape, dim_out)


# ----------------------------- Parameter init ------------------------------- #

def init_siren_params(key, dim_in, dim_hidden, dim_out, num_layers, skip,
                      w0=30.0, w0_initial=30.0, c=6.0, dtype=jnp.float32):
    """Deterministic SIREN init (same distribution as the PyTorch module)."""
    skip_flags = [i in skip for i in range(num_layers)]
    params = []
    for ind in range(num_layers):
        is_first = ind == 0
        layer_w0 = w0_initial if is_first else w0
        layer_dim_in = (dim_in if is_first else dim_hidden) + (dim_in if skip_flags[ind] else 0)
        w_std = (1.0 / layer_dim_in) if is_first else (np.sqrt(c / layer_dim_in) / layer_w0)
        key, kw, kb = jax.random.split(key, 3)
        w = jax.random.uniform(kw, (dim_hidden, layer_dim_in), dtype,
                               minval=-w_std, maxval=w_std)
        b = jax.random.uniform(kb, (dim_hidden,), dtype, minval=-w_std, maxval=w_std)
        params.append({"w": w, "b": b, "w0": layer_w0})
    # last layer (identity activation)
    w_std = np.sqrt(c / dim_hidden) / w0
    key, kw, kb = jax.random.split(key, 3)
    w = jax.random.uniform(kw, (dim_out, dim_hidden), dtype, minval=-w_std, maxval=w_std)
    b = jax.random.uniform(kb, (dim_out,), dtype, minval=-w_std, maxval=w_std)
    last = {"w": w, "b": b, "w0": w0}
    return params, last, skip_flags


# ------------------------------ JAX reference -------------------------------- #

def siren_net_reference(x, params, last, skip_flags):
    """Pure-JAX reference (mirrors the PyTorch module exactly)."""
    lead_shape = x.shape[:-1]
    x2 = x.reshape(-1, x.shape[-1])
    inp = x2
    h = x2
    for k, p in enumerate(params):
        if skip_flags[k]:
            h = jnp.concatenate((h, inp), axis=-1)
        h = jnp.sin(p["w0"] * (h @ p["w"].T + p["b"]))
    out = h @ last["w"].T + last["b"]
    return out.reshape(*lead_shape, out.shape[-1])


# ---------------------------------- Main ------------------------------------- #

if __name__ == "__main__":
    key = jax.random.PRNGKey(0)

    dim_in, dim_hidden, dim_out, num_layers = 3, 32, 4, 3
    skip = [1]  # layer 1 concatenates the input coordinates

    key, kp, kx = jax.random.split(key, 3)
    params, last, skip_flags = init_siren_params(
        kp, dim_in, dim_hidden, dim_out, num_layers, skip)

    # small input: batch=2, seq=64 points, 3-D coordinates
    x = jax.random.uniform(kx, (2, 64, dim_in), jnp.float32, minval=-1.0, maxval=1.0)

    out = siren_net_forward(x, params, last, skip_flags)
    out = jax.block_until_ready(out)

    ref = siren_net_reference(x, params, last, skip_flags)

    # bf16 hidden-layer matmuls (auto-enabled on v6e/v7x) need a looser tolerance.
    tol = 1e-4 if _default_hidden_dtype() == jnp.float32 else 2e-2
    np.testing.assert_allclose(np.asarray(out), np.asarray(ref), rtol=tol, atol=tol)
    assert out.shape == (2, 64, dim_out)

    # Feature-major I/O path: drops both wrapper-side HBM transposes.
    xT = x.reshape(-1, dim_in).T
    out_fm = siren_net_forward(xT, params, last, skip_flags, feature_major_io=True)
    out_fm = jax.block_until_ready(out_fm)
    np.testing.assert_allclose(np.asarray(out_fm.T).reshape(2, 64, dim_out),
                               np.asarray(ref), rtol=tol, atol=tol)

    print("KERNEL_OK")
</pallas_src>

<mosaic_0001>
module attributes {stable_mosaic.version = 11 : i64} {
  func.func @_siren_fused_kernel(%arg0: i32, %arg1: memref<3x128xf32, #tpu.memory_space<vmem>>, %arg2: memref<32x3xf32, #tpu.memory_space<vmem>>, %arg3: memref<32x1xf32, #tpu.memory_space<vmem>>, %arg4: memref<32x32xf32, #tpu.memory_space<vmem>>, %arg5: memref<32x3xf32, #tpu.memory_space<vmem>>, %arg6: memref<32x1xf32, #tpu.memory_space<vmem>>, %arg7: memref<32x32xf32, #tpu.memory_space<vmem>>, %arg8: memref<32x1xf32, #tpu.memory_space<vmem>>, %arg9: memref<4x32xf32, #tpu.memory_space<vmem>>, %arg10: memref<4x1xf32, #tpu.memory_space<vmem>>, %arg11: memref<4x128xf32, #tpu.memory_space<vmem>>) attributes {dimension_semantics = [#tpu.dimension_semantics<parallel>], iteration_bounds = array<i64: 1>, scalar_prefetch = 0 : i64, scratch_operands = 0 : i64, tpu.core_type = #tpu.core_type<tc>, window_params = [{transform_indices = @transform_0, window_bounds = array<i64: 3, 128>}, {pipeline_mode = #tpu.pipeline_mode<synchronous>, transform_indices = @transform_1, window_bounds = array<i64: 32, 3>}, {pipeline_mode = #tpu.pipeline_mode<synchronous>, transform_indices = @transform_2, window_bounds = array<i64: 32, 1>}, {pipeline_mode = #tpu.pipeline_mode<synchronous>, transform_indices = @transform_3, window_bounds = array<i64: 32, 32>}, {pipeline_mode = #tpu.pipeline_mode<synchronous>, transform_indices = @transform_4, window_bounds = array<i64: 32, 3>}, {pipeline_mode = #tpu.pipeline_mode<synchronous>, transform_indices = @transform_5, window_bounds = array<i64: 32, 1>}, {pipeline_mode = #tpu.pipeline_mode<synchronous>, transform_indices = @transform_6, window_bounds = array<i64: 32, 32>}, {pipeline_mode = #tpu.pipeline_mode<synchronous>, transform_indices = @transform_7, window_bounds = array<i64: 32, 1>}, {pipeline_mode = #tpu.pipeline_mode<synchronous>, transform_indices = @transform_8, window_bounds = array<i64: 4, 32>}, {pipeline_mode = #tpu.pipeline_mode<synchronous>, transform_indices = @transform_9, window_bounds = array<i64: 4, 1>}, {transform_indices = @transform_10, window_bounds = array<i64: 4, 128>}]} {
    %c0 = arith.constant 0 : index
    %c0_0 = arith.constant 0 : index
    %0 = vector.load %arg1[%c0, %c0_0] : memref<3x128xf32, #tpu.memory_space<vmem>>, vector<3x128xf32>
    %c0_1 = arith.constant 0 : index
    %c0_2 = arith.constant 0 : index
    %1 = vector.load %arg2[%c0_1, %c0_2] : memref<32x3xf32, #tpu.memory_space<vmem>>, vector<32x3xf32>
    %c0_3 = arith.constant 0 : index
    %c0_4 = arith.constant 0 : index
    %2 = vector.load %arg3[%c0_3, %c0_4] : memref<32x1xf32, #tpu.memory_space<vmem>>, vector<32x1xf32>
    %3 = vector.extract_strided_slice %1 {offsets = [0, 0], sizes = [32, 1], strides = [1, 1]} : vector<32x3xf32> to vector<32x1xf32>
    %4 = vector.extract_strided_slice %0 {offsets = [0, 0], sizes = [1, 128], strides = [1, 1]} : vector<3x128xf32> to vector<1x128xf32>
    %5 = vector.broadcast %3 : vector<32x1xf32> to vector<32x128xf32>
    %6 = vector.broadcast %4 : vector<1x128xf32> to vector<32x128xf32>
    %7 = arith.mulf %5, %6 : vector<32x128xf32>
    %8 = vector.extract_strided_slice %1 {offsets = [0, 1], sizes = [32, 1], strides = [1, 1]} : vector<32x3xf32> to vector<32x1xf32>
    %9 = vector.extract_strided_slice %0 {offsets = [1, 0], sizes = [1, 128], strides = [1, 1]} : vector<3x128xf32> to vector<1x128xf32>
    %10 = vector.broadcast %8 : vector<32x1xf32> to vector<32x128xf32>
    %11 = vector.broadcast %9 : vector<1x128xf32> to vector<32x128xf32>
    %12 = arith.mulf %10, %11 : vector<32x128xf32>
    %13 = arith.addf %7, %12 : vector<32x128xf32>
    %14 = vector.extract_strided_slice %1 {offsets = [0, 2], sizes = [32, 1], strides = [1, 1]} : vector<32x3xf32> to vector<32x1xf32>
    %15 = vector.extract_strided_slice %0 {offsets = [2, 0], sizes = [1, 128], strides = [1, 1]} : vector<3x128xf32> to vector<1x128xf32>
    %16 = vector.broadcast %14 : vector<32x1xf32> to vector<32x128xf32>
    %17 = vector.broadcast %15 : vector<1x128xf32> to vector<32x128xf32>
    %18 = arith.mulf %16, %17 : vector<32x128xf32>
    %19 = arith.addf %13, %18 : vector<32x128xf32>
    %20 = vector.broadcast %2 : vector<32x1xf32> to vector<32x128xf32>
    %21 = arith.addf %19, %20 : vector<32x128xf32>
    %22 = math.sin %21 : vector<32x128xf32>
    %c0_5 = arith.constant 0 : index
    %c0_6 = arith.constant 0 : index
    %23 = vector.load %arg4[%c0_5, %c0_6] : memref<32x32xf32, #tpu.memory_space<vmem>>, vector<32x32xf32>
    %c0_7 = arith.constant 0 : index
    %c0_8 = arith.constant 0 : index
    %24 = vector.load %arg5[%c0_7, %c0_8] : memref<32x3xf32, #tpu.memory_space<vmem>>, vector<32x3xf32>
    %c0_9 = arith.constant 0 : index
    %c0_10 = arith.constant 0 : index
    %25 = vector.load %arg6[%c0_9, %c0_10] : memref<32x1xf32, #tpu.memory_space<vmem>>, vector<32x1xf32>
    %cst = arith.constant dense<0.000000e+00> : vector<32x128xf32>
    %26 = tpu.matmul %23, %22, %cst {dimension_numbers = #tpu.dot_dimension_numbers<[1], [0], [0], [1], [0, 0, 1, 1], [], []>} : vector<32x32xf32>, vector<32x128xf32>, vector<32x128xf32> -> vector<32x128xf32>
    %27 = vector.extract_strided_slice %24 {offsets = [0, 0], sizes = [32, 1], strides = [1, 1]} : vector<32x3xf32> to vector<32x1xf32>
    %28 = vector.extract_strided_slice %0 {offsets = [0, 0], sizes = [1, 128], strides = [1, 1]} : vector<3x128xf32> to vector<1x128xf32>
    %29 = vector.broadcast %27 : vector<32x1xf32> to vector<32x128xf32>
    %30 = vector.broadcast %28 : vector<1x128xf32> to vector<32x128xf32>
    %31 = arith.mulf %29, %30 : vector<32x128xf32>
    %32 = vector.extract_strided_slice %24 {offsets = [0, 1], sizes = [32, 1], strides = [1, 1]} : vector<32x3xf32> to vector<32x1xf32>
    %33 = vector.extract_strided_slice %0 {offsets = [1, 0], sizes = [1, 128], strides = [1, 1]} : vector<3x128xf32> to vector<1x128xf32>
    %34 = vector.broadcast %32 : vector<32x1xf32> to vector<32x128xf32>
    %35 = vector.broadcast %33 : vector<1x128xf32> to vector<32x128xf32>
    %36 = arith.mulf %34, %35 : vector<32x128xf32>
    %37 = arith.addf %31, %36 : vector<32x128xf32>
    %38 = vector.extract_strided_slice %24 {offsets = [0, 2], sizes = [32, 1], strides = [1, 1]} : vector<32x3xf32> to vector<32x1xf32>
    %39 = vector.extract_strided_slice %0 {offsets = [2, 0], sizes = [1, 128], strides = [1, 1]} : vector<3x128xf32> to vector<1x128xf32>
    %40 = vector.broadcast %38 : vector<32x1xf32> to vector<32x128xf32>
    %41 = vector.broadcast %39 : vector<1x128xf32> to vector<32x128xf32>
    %42 = arith.mulf %40, %41 : vector<32x128xf32>
    %43 = arith.addf %37, %42 : vector<32x128xf32>
    %44 = arith.addf %26, %43 : vector<32x128xf32>
    %45 = vector.broadcast %25 : vector<32x1xf32> to vector<32x128xf32>
    %46 = arith.addf %44, %45 : vector<32x128xf32>
    %47 = math.sin %46 : vector<32x128xf32>
    %c0_11 = arith.constant 0 : index
    %c0_12 = arith.constant 0 : index
    %48 = vector.load %arg7[%c0_11, %c0_12] : memref<32x32xf32, #tpu.memory_space<vmem>>, vector<32x32xf32>
    %c0_13 = arith.constant 0 : index
    %c0_14 = arith.constant 0 : index
    %49 = vector.load %arg8[%c0_13, %c0_14] : memref<32x1xf32, #tpu.memory_space<vmem>>, vector<32x1xf32>
    %cst_15 = arith.constant dense<0.000000e+00> : vector<32x128xf32>
    %50 = tpu.matmul %48, %47, %cst_15 {dimension_numbers = #tpu.dot_dimension_numbers<[1], [0], [0], [1], [0, 0, 1, 1], [], []>} : vector<32x32xf32>, vector<32x128xf32>, vector<32x128xf32> -> vector<32x128xf32>
    %51 = vector.broadcast %49 : vector<32x1xf32> to vector<32x128xf32>
    %52 = arith.addf %50, %51 : vector<32x128xf32>
    %53 = math.sin %52 : vector<32x128xf32>
    %c0_16 = arith.constant 0 : index
    %c0_17 = arith.constant 0 : index
    %54 = vector.load %arg9[%c0_16, %c0_17] : memref<4x32xf32, #tpu.memory_space<vmem>>, vector<4x32xf32>
    %c0_18 = arith.constant 0 : index
    %c0_19 = arith.constant 0 : index
    %55 = vector.load %arg10[%c0_18, %c0_19] : memref<4x1xf32, #tpu.memory_space<vmem>>, vector<4x1xf32>
    %cst_20 = arith.constant dense<0.000000e+00> : vector<4x128xf32>
    %56 = tpu.matmul %54, %53, %cst_20 {dimension_numbers = #tpu.dot_dimension_numbers<[1], [0], [0], [1], [0, 0, 1, 1], [], []>} : vector<4x32xf32>, vector<32x128xf32>, vector<4x128xf32> -> vector<4x128xf32>
    %57 = vector.broadcast %55 : vector<4x1xf32> to vector<4x128xf32>
    %58 = arith.addf %56, %57 : vector<4x128xf32>
    %c0_21 = arith.constant 0 : index
    %c0_22 = arith.constant 0 : index
    %59 = vector.load %arg11[%c0_21, %c0_22] : memref<4x128xf32, #tpu.memory_space<vmem>>, vector<4x128xf32>
    tpu.vector_store %arg11[%c0_21, %c0_22], %58 {strides = array<i32>} : memref<4x128xf32, #tpu.memory_space<vmem>>, vector<4x128xf32>,
    return
  }
  func.func @transform_0(%arg0: i32) -> (i32, i32) {
    %c0_i32 = arith.constant 0 : i32
    %c0_i32_0 = arith.constant 0 : i32
    return %c0_i32, %arg0 : i32, i32
  }
  func.func @transform_1(%arg0: i32) -> (i32, i32) {
    %c0_i32 = arith.constant 0 : i32
    %c0_i32_0 = arith.constant 0 : i32
    %c0_i32_1 = arith.constant 0 : i32
    return %c0_i32, %c0_i32_0 : i32, i32
  }
  func.func @transform_2(%arg0: i32) -> (i32, i32) {
    %c0_i32 = arith.constant 0 : i32
    %c0_i32_0 = arith.constant 0 : i32
    %c0_i32_1 = arith.constant 0 : i32
    return %c0_i32, %c0_i32_0 : i32, i32
  }
  func.func @transform_3(%arg0: i32) -> (i32, i32) {
    %c0_i32 = arith.constant 0 : i32
    %c0_i32_0 = arith.constant 0 : i32
    %c0_i32_1 = arith.constant 0 : i32
    return %c0_i32, %c0_i32_0 : i32, i32
  }
  func.func @transform_4(%arg0: i32) -> (i32, i32) {
    %c0_i32 = arith.constant 0 : i32
    %c0_i32_0 = arith.constant 0 : i32
    %c0_i32_1 = arith.constant 0 : i32
    return %c0_i32, %c0_i32_0 : i32, i32
  }
  func.func @transform_5(%arg0: i32) -> (i32, i32) {
    %c0_i32 = arith.constant 0 : i32
    %c0_i32_0 = arith.constant 0 : i32
    %c0_i32_1 = arith.constant 0 : i32
    return %c0_i32, %c0_i32_0 : i32, i32
  }
  func.func @transform_6(%arg0: i32) -> (i32, i32) {
    %c0_i32 = arith.constant 0 : i32
    %c0_i32_0 = arith.constant 0 : i32
    %c0_i32_1 = arith.constant 0 : i32
    return %c0_i32, %c0_i32_0 : i32, i32
  }
  func.func @transform_7(%arg0: i32) -> (i32, i32) {
    %c0_i32 = arith.constant 0 : i32
    %c0_i32_0 = arith.constant 0 : i32
    %c0_i32_1 = arith.constant 0 : i32
    return %c0_i32, %c0_i32_0 : i32, i32
  }
  func.func @transform_8(%arg0: i32) -> (i32, i32) {
    %c0_i32 = arith.constant 0 : i32
    %c0_i32_0 = arith.constant 0 : i32
    %c0_i32_1 = arith.constant 0 : i32
    return %c0_i32, %c0_i32_0 : i32, i32
  }
  func.func @transform_9(%arg0: i32) -> (i32, i32) {
    %c0_i32 = arith.constant 0 : i32
    %c0_i32_0 = arith.constant 0 : i32
    %c0_i32_1 = arith.constant 0 : i32
    return %c0_i32, %c0_i32_0 : i32, i32
  }
  func.func @transform_10(%arg0: i32) -> (i32, i32) {
    %c0_i32 = arith.constant 0 : i32
    %c0_i32_0 = arith.constant 0 : i32
    return %c0_i32, %arg0 : i32, i32
  }
}

</mosaic_0001>

<llo_original>
// kernel: tpu_custom_call.1
$region0: #{tpu_custom_call.1}
  #allocation0 [shape = 'u32[]', space=smem, size = 0x4, offset = 0x4, fixed_abs, tag = 'smem constant byte address 0x4 - core index']
  #allocation1 [shape = 'u32[72,128]{1,0:T(1,128)}', space=vmem, size = 0x9000, scoped, tag = 'internal scratch']
  %s0 = inlined_call_operand.vmem [shape: f32[3,128], index: 0, kind: input, shape index: {}]
  %s1 = inlined_call_operand.vmem [shape: f32[32,3], index: 1, kind: input, shape index: {}]
  %s2 = inlined_call_operand.vmem [shape: f32[32,1], index: 2, kind: input, shape index: {}]
  %s3 = inlined_call_operand.vmem [shape: f32[32,32], index: 3, kind: input, shape index: {}]
  %s4 = inlined_call_operand.vmem [shape: f32[32,3], index: 4, kind: input, shape index: {}]
  %s5 = inlined_call_operand.vmem [shape: f32[32,1], index: 5, kind: input, shape index: {}]
  %s6 = inlined_call_operand.vmem [shape: f32[32,32], index: 6, kind: input, shape index: {}]
  %s7 = inlined_call_operand.vmem [shape: f32[32,1], index: 7, kind: input, shape index: {}]
  %s8 = inlined_call_operand.vmem [shape: f32[4,32], index: 8, kind: input, shape index: {}]
  %s9 = inlined_call_operand.vmem [shape: f32[4,1], index: 9, kind: input, shape index: {}]
  %s10 = inlined_call_operand.hbm [shape: f32[4,128], index: 10, kind: output, shape index: {}]
  %s11 = sld [smem:[#allocation0]]
  $region50: #{tpu_custom_call.1} parent=0
    _
  %s13 = ssub.s32 1, %s11
  %s14 = scalar_select 0, %s13, %s11
  $region1: #{tpu_custom_call.1} parent=0
    #allocation2 [shape = 'u8[2048]{0}', space=vmem, size = 0x800, scoped, tag = 'output window, operand 0, single buffered']
    #allocation3 [shape = 's32[1]{0}', space=sflag, size = 0x4, scoped, tag = 'scoped memory for tpu_custom_call.1']
    %15 = vsyncpa [#allocation3], 0
    // Predicated region
    $region2: #{tpu_custom_call.1} parent=1 // pred_check
      _
    $region3: #{tpu_custom_call.1} parent=1 // pred_check_branch
      %17 = sbr.rel (0) target = $region5
    $region4: #{tpu_custom_call.1} parent=1 // pred_region
      _
    $region5: #{tpu_custom_call.1} parent=1 // pred_fallthru
      _
    // Predicated region
    $region6: #{tpu_custom_call.1} parent=1 // pred_check
      _
    $region7: #{tpu_custom_call.1} parent=1 // pred_check_branch
      %19 = sbr.rel (0) target = $region9
    $region8: #{tpu_custom_call.1} parent=1 // pred_region
      _
    $region9: #{tpu_custom_call.1} parent=1 // pred_fallthru
      _
    // Predicated region
    $region10: #{tpu_custom_call.1} parent=1 // pred_check
      _
    $region11: #{tpu_custom_call.1} parent=1 // pred_check_branch
      %21 = sbr.rel (0) target = $region13
    $region12: #{tpu_custom_call.1} parent=1 // pred_region
      _
    $region13: #{tpu_custom_call.1} parent=1 // pred_fallthru
      _
    // Predicated region
    $region14: #{tpu_custom_call.1} parent=1 // pred_check
      _
    $region15: #{tpu_custom_call.1} parent=1 // pred_check_branch
      %23 = sbr.rel (0) target = $region17
    $region16: #{tpu_custom_call.1} parent=1 // pred_region
      _
    $region17: #{tpu_custom_call.1} parent=1 // pred_fallthru
      _
    // Predicated region
    $region18: #{tpu_custom_call.1} parent=1 // pred_check
      _
    $region19: #{tpu_custom_call.1} parent=1 // pred_check_branch
      %25 = sbr.rel (0) target = $region21
    $region20: #{tpu_custom_call.1} parent=1 // pred_region
      _
    $region21: #{tpu_custom_call.1} parent=1 // pred_fallthru
      _
    // Predicated region
    $region22: #{tpu_custom_call.1} parent=1 // pred_check
      _
    $region23: #{tpu_custom_call.1} parent=1 // pred_check_branch
      %27 = sbr.rel (0) target = $region25
    $region24: #{tpu_custom_call.1} parent=1 // pred_region
      _
    $region25: #{tpu_custom_call.1} parent=1 // pred_fallthru
      _
    // Predicated region
    $region26: #{tpu_custom_call.1} parent=1 // pred_check
      _
    $region27: #{tpu_custom_call.1} parent=1 // pred_check_branch
      %29 = sbr.rel (0) target = $region29
    $region28: #{tpu_custom_call.1} parent=1 // pred_region
      _
    $region29: #{tpu_custom_call.1} parent=1 // pred_fallthru
      _
    // Predicated region
    $region30: #{tpu_custom_call.1} parent=1 // pred_check
      _
    $region31: #{tpu_custom_call.1} parent=1 // pred_check_branch
      %31 = sbr.rel (0) target = $region33
    $region32: #{tpu_custom_call.1} parent=1 // pred_region
      _
    $region33: #{tpu_custom_call.1} parent=1 // pred_fallthru
      _
    // Predicated region
    $region34: #{tpu_custom_call.1} parent=1 // pred_check
      _
    $region35: #{tpu_custom_call.1} parent=1 // pred_check_branch
      %33 = sbr.rel (0) target = $region37
    $region36: #{tpu_custom_call.1} parent=1 // pred_region
      _
    $region37: #{tpu_custom_call.1} parent=1 // pred_fallthru
      _
    // Predicated region
    $region38: #{tpu_custom_call.1} parent=1 // pred_check
      _
    $region39: #{tpu_custom_call.1} parent=1 // pred_check_branch
      %35 = sbr.rel (0) target = $region41
    $region40: #{tpu_custom_call.1} parent=1 // pred_region
      _
    $region41: #{tpu_custom_call.1} parent=1 // pred_fallthru
      _
    %v36 = vld [vmem:[%s0] sm:$0x7]
    %v37 = vld [vmem:[%s1] sm:$0xff]
    %v38 = vld [vmem:[%s1 + $0x8] sm:$0xff]
    %v39 = vld [vmem:[%s1 + $0x10] sm:$0xff]
    %v40 = vld [vmem:[%s1 + $0x18] sm:$0xff]
    %v41 = vld [vmem:[%s2] sm:$0xff]
    %v42 = vld [vmem:[%s2 + $0x8] sm:$0xff]
    %v43 = vld [vmem:[%s2 + $0x10] sm:$0xff]
    %v44 = vld [vmem:[%s2 + $0x18] sm:$0xff]
    %46 = vset.pattern.permute.xlu0 0
    %47 = vperm.xlu0 %46, %v37
    %v48 = vpop.permute.xlu0 %47
    %51 = vset.pattern.permute.xlu0 0
    %52 = vperm.xlu0 %51, %v38
    %v53 = vpop.permute.xlu0 %52
    %56 = vset.pattern.permute.xlu0 0
    %57 = vperm.xlu0 %56, %v39
    %v58 = vpop.permute.xlu0 %57
    %61 = vset.pattern.permute.xlu0 0
    %62 = vperm.xlu0 %61, %v40
    %v63 = vpop.permute.xlu0 %62
    %v65 = vperm.slane %v36, 0
    %v66 = vmul.f32 %v48, %v65
    %v67 = vmul.f32 %v53, %v65
    %v68 = vmul.f32 %v58, %v65
    %v69 = vmul.f32 %v63, %v65
    %70 = vset.pattern.permute.xlu0 1
    %71 = vperm.xlu0 %70, %v37
    %v72 = vpop.permute.xlu0 %71
    %74 = vset.pattern.permute.xlu0 1
    %75 = vperm.xlu0 %74, %v38
    %v76 = vpop.permute.xlu0 %75
    %78 = vset.pattern.permute.xlu0 1
    %79 = vperm.xlu0 %78, %v39
    %v80 = vpop.permute.xlu0 %79
    %82 = vset.pattern.permute.xlu0 1
    %83 = vperm.xlu0 %82, %v40
    %v84 = vpop.permute.xlu0 %83
    %v86 = vperm.slane %v36, 1
    %v87 = vmul.f32 %v72, %v86
    %v88 = vmul.f32 %v76, %v86
    %v89 = vmul.f32 %v80, %v86
    %v90 = vmul.f32 %v84, %v86
    %v91 = vadd.f32 %v66, %v87
    %v92 = vadd.f32 %v67, %v88
    %v93 = vadd.f32 %v68, %v89
    %v94 = vadd.f32 %v69, %v90
    %95 = vset.pattern.permute.xlu0 2
    %96 = vperm.xlu0 %95, %v37
    %v97 = vpop.permute.xlu0 %96
    %99 = vset.pattern.permute.xlu0 2
    %100 = vperm.xlu0 %99, %v38
    %v101 = vpop.permute.xlu0 %100
    %103 = vset.pattern.permute.xlu0 2
    %104 = vperm.xlu0 %103, %v39
    %v105 = vpop.permute.xlu0 %104
    %107 = vset.pattern.permute.xlu0 2
    %108 = vperm.xlu0 %107, %v40
    %v109 = vpop.permute.xlu0 %108
    %v111 = vperm.slane %v36, 2
    %v112 = vmul.f32 %v97, %v111
    %v113 = vmul.f32 %v101, %v111
    %v114 = vmul.f32 %v105, %v111
    %v115 = vmul.f32 %v109, %v111
    %v116 = vadd.f32 %v91, %v112
    %v117 = vadd.f32 %v92, %v113
    %v118 = vadd.f32 %v93, %v114
    %v119 = vadd.f32 %v94, %v115
    %121 = vset.pattern.permute.xlu0 0
    %122 = vperm.xlu0 %121, %v41
    %v123 = vpop.permute.xlu0 %122
    %126 = vset.pattern.permute.xlu0 0
    %127 = vperm.xlu0 %126, %v42
    %v128 = vpop.permute.xlu0 %127
    %131 = vset.pattern.permute.xlu0 0
    %132 = vperm.xlu0 %131, %v43
    %v133 = vpop.permute.xlu0 %132
    %136 = vset.pattern.permute.xlu0 0
    %137 = vperm.xlu0 %136, %v44
    %v138 = vpop.permute.xlu0 %137
    %v140 = vadd.f32 %v116, %v123
    %v141 = vadd.f32 %v117, %v128
    %v142 = vadd.f32 %v118, %v133
    %v143 = vadd.f32 %v119, %v138
    %v144 = vand.u32 2147483647, %v140
    %vm145 = vcmp.le.f32.partialorder %v144, 0.7853982
    %vm146 = vcmp.lt.s32.totalorder %v140, 0
    %v147 = vand.u32 %v140, 2139095040
    %v148 = vshrl.u32 %v147, 23
    %v149 = vsub.s32 %v148, 127
    %v150 = vand.u32 2147483647, %v140
    %v151 = vand.u32 %v150, 8388607
    %v152 = vor.u32 %v151, 8388608
    %v153 = vsub.s32 0, %v152
    %v154 = vadd.s32 %v149, 1
    %vm155 = vcmp.gt.s32.totalorder %v154, 0
    %v156 = vsel %vm155, %v154, 0
    %v157 = vshrl.u32 %v156, 5
    %v158 = vand.u32 %v156, 31
    %v159 = vsub.s32 32, %v158
    %v160 = vshrl.u32 683565275, %v159
    %v161 = vshll.u32 683565275, %v158
    %v162 = vshrl.u32 2475754826, %v159
    %v163 = vor.u32 %v161, %v162
    %v164 = vshll.u32 2475754826, %v158
    %v165 = vshrl.u32 2131351028, %v159
    %v166 = vor.u32 %v164, %v165
    %v167 = vshll.u32 2131351028, %v158
    %v168 = vshrl.u32 2102212464, %v159
    %v169 = vor.u32 %v167, %v168
    %v170 = vshll.u32 2102212464, %v158
    %v171 = vshrl.u32 920167782, %v159
    %v172 = vor.u32 %v170, %v171
    %v173 = vshll.u32 920167782, %v158
    %v174 = vshrl.u32 1326507024, %v159
    %v175 = vor.u32 %v173, %v174
    %vm176 = vcmp.lt.s32.totalorder %v157, 1
    %vm177 = vcmp.lt.s32.totalorder %v157, 2
    %vm178 = vcmp.lt.s32.totalorder %v157, 3
    %vm179 = vcmp.lt.s32.totalorder %v157, 4
    %v180 = vsel %vm176, %v160, %v163
    %v181 = vsel %vm179, %v169, 2102212464
    %v182 = vsel %vm178, %v166, %v181
    %v183 = vsel %vm177, %v180, %v182
    %v184 = vsel %vm176, %v163, %v166
    %v185 = vsel %vm179, %v172, 920167782
    %v186 = vsel %vm178, %v169, %v185
    %v187 = vsel %vm177, %v184, %v186
    %v188 = vsel %vm176, %v166, %v169
    %v189 = vsel %vm179, %v175, 1326507024
    %v190 = vsel %vm178, %v172, %v189
    %v191 = vsel %vm177, %v188, %v190
    %v192 = vshll.u32 %v152, 8
    %v193 = vand.u32 %v192, 65535
    %v194 = vshrl.u32 %v192, 16
    %v195 = vand.u32 %v191, 65535
    %v196 = vshrl.u32 %v191, 16
    %v197 = vmul.u32 %v193, %v195
    %v198 = vmul.u32 %v193, %v196
    %v199 = vmul.u32 %v194, %v195
    %v200 = vmul.u32 %v194, %v196
    %v201 = vshll.u32 %v198, 16
    %v202 = vshrl.u32 %v198, 16
    %v203 = vshll.u32 %v199, 16
    %v204 = vshrl.u32 %v199, 16
    %vm205 = vc.u32 %v197, %v201
    %v206 = vsel %vm205, 1, 0
    %v207 = vadd.s32 %v197, %v201
    %v208 = vadd.s32 %v200, %v206
    %vm209 = vc.u32 %v207, %v203
    %v210 = vsel %vm209, 1, 0
    %v211 = vadd.s32 %v207, %v203
    %v212 = vadd.s32 %v208, %v210
    %v213 = vadd.s32 %v212, %v202
    %v214 = vadd.s32 %v213, %v204
    %v215 = vand.u32 %v192, 65535
    %v216 = vshrl.u32 %v192, 16
    %v217 = vand.u32 %v187, 65535
    %v218 = vshrl.u32 %v187, 16
    %v219 = vmul.u32 %v215, %v217
    %v220 = vmul.u32 %v215, %v218
    %v221 = vmul.u32 %v216, %v217
    %v222 = vmul.u32 %v216, %v218
    %v223 = vshll.u32 %v220, 16
    %v224 = vshrl.u32 %v220, 16
    %v225 = vshll.u32 %v221, 16
    %v226 = vshrl.u32 %v221, 16
    %vm227 = vc.u32 %v219, %v223
    %v228 = vsel %vm227, 1, 0
    %v229 = vadd.s32 %v219, %v223
    %v230 = vadd.s32 %v222, %v228
    %vm231 = vc.u32 %v229, %v225
    %v232 = vsel %vm231, 1, 0
    %v233 = vadd.s32 %v229, %v225
    %v234 = vadd.s32 %v230, %v232
    %v235 = vadd.s32 %v234, %v224
    %v236 = vadd.s32 %v235, %v226
    %v237 = vmul.u32 %v192, %v183
    %v238 = vadd.s32 %v214, %v233
    %vm239 = vc.u32 %v214, %v233
    %v240 = vadd.s32 %v236, 1
    %v241 = vsel %vm239, %v240, %v236
    %v242 = vadd.s32 %v237, %v241
    %v243 = vadd.s32 %v242, 536870912
    %v244 = vshrl.u32 %v243, 30
    %v245 = vshll.u32 %v244, 30
    %v246 = vsub.s32 %v242, %v245
    %vm247 = vcmp.lt.s32.totalorder %v246, 0
    %v248 = vsub.s32 0, %v246
    %v249 = vsel %vm247, %v248, %v246
    %v250 = vclz %v249
    %v251 = vsub.s32 %v250, 2
    %vm252 = vcmp.gt.s32.totalorder 0, %v251
    %v253 = vsel %vm252, 0, %v251
    %v254 = vsub.s32 32, %v253
    %v255 = vshll.u32 %v246, %v253
    %v256 = vshrl.u32 %v238, %v254
    %v257 = vor.u32 %v255, %v256
    %v258 = vsub.s32 4294967266, %v253
    %v259 = vadd.s32 %v258, 127
    %v260 = vshll.u32 %v259, 23
    %v261 = vor.u32 4788187, %v260
    %v262 = vand.u32 2147483647, %v261
    %v264 = vcvt.s32.f32 %v257
    %v265 = vmul.f32 %v264, %v262
    %v266 = vxor.u32 %v265, 2147483648
    %v267 = vsel %vm146, %v266, %v265
    %v268 = vsub.s32 4, %v244
    %v269 = vsel %vm146, %v268, %v244
    %v270 = vsel %vm145, %v140, %v267
    %v271 = vsel %vm145, 0, %v269
    %v272 = vmul.f32 %v270, %v270
    %v273 = vmul.f32 %v272, -0.001358992
    %v274 = vadd.f32 %v273, 0.041655596
    %v275 = vmul.f32 %v272, %v274
    %v276 = vadd.f32 %v275, -0.4999988
    %v277 = vmul.f32 %v272, %v276
    %v278 = vadd.f32 1.0, %v277
    %v279 = vmul.f32 %v270, %v270
    %v280 = vmul.f32 %v279, -0.00019511016
    %v281 = vadd.f32 %v280, 0.008332121
    %v282 = vmul.f32 %v279, %v281
    %v283 = vadd.f32 %v282, -0.16666654
    %v284 = vmul.f32 %v279, %v283
    %v285 = vadd.f32 %v284, 1.0
    %v286 = vmul.f32 %v285, %v270
    %vm287 = vweird.f32 %v140
    %v288 = vadd.s32 %v271, 3
    %v289 = vand.u32 %v288, 3
    %vm290 = vcmp.lt.s32.totalorder %v289, 2
    %vm291 = vcmp.eq.s32.totalorder %v289, 0
    %v292 = vxor.u32 %v286, 2147483648
    %v293 = vsel %vm291, %v278, %v292
    %vm294 = vcmp.eq.s32.totalorder %v289, 2
    %v295 = vxor.u32 %v278, 2147483648
    %v296 = vsel %vm294, %v295, %v286
    %v297 = vsel %vm290, %v293, %v296
    %v298 = vsel %vm287, nan, %v297
    %v299 = vand.u32 2147483647, %v141
    %vm300 = vcmp.le.f32.partialorder %v299, 0.7853982
    %vm301 = vcmp.lt.s32.totalorder %v141, 0
    %v302 = vand.u32 %v141, 2139095040
    %v303 = vshrl.u32 %v302, 23
    %v304 = vsub.s32 %v303, 127
    %v305 = vand.u32 2147483647, %v141
    %v306 = vand.u32 %v305, 8388607
    %v307 = vor.u32 %v306, 8388608
    %v308 = vsub.s32 0, %v307
    %v309 = vadd.s32 %v304, 1
    %vm310 = vcmp.gt.s32.totalorder %v309, 0
    %v311 = vsel %vm310, %v309, 0
    %v312 = vshrl.u32 %v311, 5
    %v313 = vand.u32 %v311, 31
    %v314 = vsub.s32 32, %v313
    %v315 = vshrl.u32 683565275, %v314
    %v316 = vshll.u32 683565275, %v313
    %v317 = vshrl.u32 2475754826, %v314
    %v318 = vor.u32 %v316, %v317
    %v319 = vshll.u32 2475754826, %v313
    %v320 = vshrl.u32 2131351028, %v314
    %v321 = vor.u32 %v319, %v320
    %v322 = vshll.u32 2131351028, %v313
    %v323 = vshrl.u32 2102212464, %v314
    %v324 = vor.u32 %v322, %v323
    %v325 = vshll.u32 2102212464, %v313
    %v326 = vshrl.u32 920167782, %v314
    %v327 = vor.u32 %v325, %v326
    %v328 = vshll.u32 920167782, %v313
    %v329 = vshrl.u32 1326507024, %v314
    %v330 = vor.u32 %v328, %v329
    %vm331 = vcmp.lt.s32.totalorder %v312, 1
    %vm332 = vcmp.lt.s32.totalorder %v312, 2
    %vm333 = vcmp.lt.s32.totalorder %v312, 3
    %vm334 = vcmp.lt.s32.totalorder %v312, 4
    %v335 = vsel %vm331, %v315, %v318
    %v336 = vsel %vm334, %v324, 2102212464
    %v337 = vsel %vm333, %v321, %v336
    %v338 = vsel %vm332, %v335, %v337
    %v339 = vsel %vm331, %v318, %v321
    %v340 = vsel %vm334, %v327, 920167782
    %v341 = vsel %vm333, %v324, %v340
    %v342 = vsel %vm332, %v339, %v341
    %v343 = vsel %vm331, %v321, %v324
    %v344 = vsel %vm334, %v330, 1326507024
    %v345 = vsel %vm333, %v327, %v344
    %v346 = vsel %vm332, %v343, %v345
    %v347 = vshll.u32 %v307, 8
    %v348 = vand.u32 %v347, 65535
    %v349 = vshrl.u32 %v347, 16
    %v350 = vand.u32 %v346, 65535
    %v351 = vshrl.u32 %v346, 16
    %v352 = vmul.u32 %v348, %v350
    %v353 = vmul.u32 %v348, %v351
    %v354 = vmul.u32 %v349, %v350
    %v355 = vmul.u32 %v349, %v351
    %v356 = vshll.u32 %v353, 16
    %v357 = vshrl.u32 %v353, 16
    %v358 = vshll.u32 %v354, 16
    %v359 = vshrl.u32 %v354, 16
    %vm360 = vc.u32 %v352, %v356
    %v361 = vsel %vm360, 1, 0
    %v362 = vadd.s32 %v352, %v356
    %v363 = vadd.s32 %v355, %v361
    %vm364 = vc.u32 %v362, %v358
    %v365 = vsel %vm364, 1, 0
    %v366 = vadd.s32 %v362, %v358
    %v367 = vadd.s32 %v363, %v365
    %v368 = vadd.s32 %v367, %v357
    %v369 = vadd.s32 %v368, %v359
    %v370 = vand.u32 %v347, 65535
    %v371 = vshrl.u32 %v347, 16
    %v372 = vand.u32 %v342, 65535
    %v373 = vshrl.u32 %v342, 16
    %v374 = vmul.u32 %v370, %v372
    %v375 = vmul.u32 %v370, %v373
    %v376 = vmul.u32 %v371, %v372
    %v377 = vmul.u32 %v371, %v373
    %v378 = vshll.u32 %v375, 16
    %v379 = vshrl.u32 %v375, 16
    %v380 = vshll.u32 %v376, 16
    %v381 = vshrl.u32 %v376, 16
    %vm382 = vc.u32 %v374, %v378
    %v383 = vsel %vm382, 1, 0
    %v384 = vadd.s32 %v374, %v378
    %v385 = vadd.s32 %v377, %v383
    %vm386 = vc.u32 %v384, %v380
    %v387 = vsel %vm386, 1, 0
    %v388 = vadd.s32 %v384, %v380
    %v389 = vadd.s32 %v385, %v387
    %v390 = vadd.s32 %v389, %v379
    %v391 = vadd.s32 %v390, %v381
    %v392 = vmul.u32 %v347, %v338
    %v393 = vadd.s32 %v369, %v388
    %vm394 = vc.u32 %v369, %v388
    %v395 = vadd.s32 %v391, 1
    %v396 = vsel %vm394, %v395, %v391
    %v397 = vadd.s32 %v392, %v396
    %v398 = vadd.s32 %v397, 536870912
    %v399 = vshrl.u32 %v398, 30
    %v400 = vshll.u32 %v399, 30
    %v401 = vsub.s32 %v397, %v400
    %vm402 = vcmp.lt.s32.totalorder %v401, 0
    %v403 = vsub.s32 0, %v401
    %v404 = vsel %vm402, %v403, %v401
    %v405 = vclz %v404
    %v406 = vsub.s32 %v405, 2
    %vm407 = vcmp.gt.s32.totalorder 0, %v406
    %v408 = vsel %vm407, 0, %v406
    %v409 = vsub.s32 32, %v408
    %v410 = vshll.u32 %v401, %v408
    %v411 = vshrl.u32 %v393, %v409
    %v412 = vor.u32 %v410, %v411
    %v413 = vsub.s32 4294967266, %v408
    %v414 = vadd.s32 %v413, 127
    %v415 = vshll.u32 %v414, 23
    %v416 = vor.u32 4788187, %v415
    %v417 = vand.u32 2147483647, %v416
    %v419 = vcvt.s32.f32 %v412
    %v420 = vmul.f32 %v419, %v417
    %v421 = vxor.u32 %v420, 2147483648
    %v422 = vsel %vm301, %v421, %v420
    %v423 = vsub.s32 4, %v399
    %v424 = vsel %vm301, %v423, %v399
    %v425 = vsel %vm300, %v141, %v422
    %v426 = vsel %vm300, 0, %v424
    %v427 = vmul.f32 %v425, %v425
    %v428 = vmul.f32 %v427, -0.001358992
    %v429 = vadd.f32 %v428, 0.041655596
    %v430 = vmul.f32 %v427, %v429
    %v431 = vadd.f32 %v430, -0.4999988
    %v432 = vmul.f32 %v427, %v431
    %v433 = vadd.f32 1.0, %v432
    %v434 = vmul.f32 %v425, %v425
    %v435 = vmul.f32 %v434, -0.00019511016
    %v436 = vadd.f32 %v435, 0.008332121
    %v437 = vmul.f32 %v434, %v436
    %v438 = vadd.f32 %v437, -0.16666654
    %v439 = vmul.f32 %v434, %v438
    %v440 = vadd.f32 %v439, 1.0
    %v441 = vmul.f32 %v440, %v425
    %vm442 = vweird.f32 %v141
    %v443 = vadd.s32 %v426, 3
    %v444 = vand.u32 %v443, 3
    %vm445 = vcmp.lt.s32.totalorder %v444, 2
    %vm446 = vcmp.eq.s32.totalorder %v444, 0
    %v447 = vxor.u32 %v441, 2147483648
    %v448 = vsel %vm446, %v433, %v447
    %vm449 = vcmp.eq.s32.totalorder %v444, 2
    %v450 = vxor.u32 %v433, 2147483648
    %v451 = vsel %vm449, %v450, %v441
    %v452 = vsel %vm445, %v448, %v451
    %v453 = vsel %vm442, nan, %v452
    %v454 = vand.u32 2147483647, %v142
    %vm455 = vcmp.le.f32.partialorder %v454, 0.7853982
    %vm456 = vcmp.lt.s32.totalorder %v142, 0
    %v457 = vand.u32 %v142, 2139095040
    %v458 = vshrl.u32 %v457, 23
    %v459 = vsub.s32 %v458, 127
    %v460 = vand.u32 2147483647, %v142
    %v461 = vand.u32 %v460, 8388607
    %v462 = vor.u32 %v461, 8388608
    %v463 = vsub.s32 0, %v462
    %v464 = vadd.s32 %v459, 1
    %vm465 = vcmp.gt.s32.totalorder %v464, 0
    %v466 = vsel %vm465, %v464, 0
    %v467 = vshrl.u32 %v466, 5
    %v468 = vand.u32 %v466, 31
    %v469 = vsub.s32 32, %v468
    %v470 = vshrl.u32 683565275, %v469
    %v471 = vshll.u32 683565275, %v468
    %v472 = vshrl.u32 2475754826, %v469
    %v473 = vor.u32 %v471, %v472
    %v474 = vshll.u32 2475754826, %v468
    %v475 = vshrl.u32 2131351028, %v469
    %v476 = vor.u32 %v474, %v475
    %v477 = vshll.u32 2131351028, %v468
    %v478 = vshrl.u32 2102212464, %v469
    %v479 = vor.u32 %v477, %v478
    %v480 = vshll.u32 2102212464, %v468
    %v481 = vshrl.u32 920167782, %v469
    %v482 = vor.u32 %v480, %v481
    %v483 = vshll.u32 920167782, %v468
    %v484 = vshrl.u32 1326507024, %v469
    %v485 = vor.u32 %v483, %v484
    %vm486 = vcmp.lt.s32.totalorder %v467, 1
    %vm487 = vcmp.lt.s32.totalorder %v467, 2
    %vm488 = vcmp.lt.s32.totalorder %v467, 3
    %vm489 = vcmp.lt.s32.totalorder %v467, 4
    %v490 = vsel %vm486, %v470, %v473
    %v491 = vsel %vm489, %v479, 2102212464
    %v492 = vsel %vm488, %v476, %v491
    %v493 = vsel %vm487, %v490, %v492
    %v494 = vsel %vm486, %v473, %v476
    %v495 = vsel %vm489, %v482, 920167782
    %v496 = vsel %vm488, %v479, %v495
    %v497 = vsel %vm487, %v494, %v496
    %v498 = vsel %vm486, %v476, %v479
    %v499 = vsel %vm489, %v485, 1326507024
    %v500 = vsel %vm488, %v482, %v499
    %v501 = vsel %vm487, %v498, %v500
    %v502 = vshll.u32 %v462, 8
    %v503 = vand.u32 %v502, 65535
    %v504 = vshrl.u32 %v502, 16
    %v505 = vand.u32 %v501, 65535
    %v506 = vshrl.u32 %v501, 16
    %v507 = vmul.u32 %v503, %v505
    %v508 = vmul.u32 %v503, %v506
    %v509 = vmul.u32 %v504, %v505
    %v510 = vmul.u32 %v504, %v506
    %v511 = vshll.u32 %v508, 16
    %v512 = vshrl.u32 %v508, 16
    %v513 = vshll.u32 %v509, 16
    %v514 = vshrl.u32 %v509, 16
    %vm515 = vc.u32 %v507, %v511
    %v516 = vsel %vm515, 1, 0
    %v517 = vadd.s32 %v507, %v511
    %v518 = vadd.s32 %v510, %v516
    %vm519 = vc.u32 %v517, %v513
    %v520 = vsel %vm519, 1, 0
    %v521 = vadd.s32 %v517, %v513
    %v522 = vadd.s32 %v518, %v520
    %v523 = vadd.s32 %v522, %v512
    %v524 = vadd.s32 %v523, %v514
    %v525 = vand.u32 %v502, 65535
    %v526 = vshrl.u32 %v502, 16
    %v527 = vand.u32 %v497, 65535
    %v528 = vshrl.u32 %v497, 16
    %v529 = vmul.u32 %v525, %v527
    %v530 = vmul.u32 %v525, %v528
    %v531 = vmul.u32 %v526, %v527
    %v532 = vmul.u32 %v526, %v528
    %v533 = vshll.u32 %v530, 16
    %v534 = vshrl.u32 %v530, 16
    %v535 = vshll.u32 %v531, 16
    %v536 = vshrl.u32 %v531, 16
    %vm537 = vc.u32 %v529, %v533
    %v538 = vsel %vm537, 1, 0
    %v539 = vadd.s32 %v529, %v533
    %v540 = vadd.s32 %v532, %v538
    %vm541 = vc.u32 %v539, %v535
    %v542 = vsel %vm541, 1, 0
    %v543 = vadd.s32 %v539, %v535
    %v544 = vadd.s32 %v540, %v542
    %v545 = vadd.s32 %v544, %v534
    %v546 = vadd.s32 %v545, %v536
    %v547 = vmul.u32 %v502, %v493
    %v548 = vadd.s32 %v524, %v543
    %vm549 = vc.u32 %v524, %v543
    %v550 = vadd.s32 %v546, 1
    %v551 = vsel %vm549, %v550, %v546
    %v552 = vadd.s32 %v547, %v551
    %v553 = vadd.s32 %v552, 536870912
    %v554 = vshrl.u32 %v553, 30
    %v555 = vshll.u32 %v554, 30
    %v556 = vsub.s32 %v552, %v555
    %vm557 = vcmp.lt.s32.totalorder %v556, 0
    %v558 = vsub.s32 0, %v556
    %v559 = vsel %vm557, %v558, %v556
    %v560 = vclz %v559
    %v561 = vsub.s32 %v560, 2
    %vm562 = vcmp.gt.s32.totalorder 0, %v561
    %v563 = vsel %vm562, 0, %v561
    %v564 = vsub.s32 32, %v563
    %v565 = vshll.u32 %v556, %v563
    %v566 = vshrl.u32 %v548, %v564
    %v567 = vor.u32 %v565, %v566
    %v568 = vsub.s32 4294967266, %v563
    %v569 = vadd.s32 %v568, 127
    %v570 = vshll.u32 %v569, 23
    %v571 = vor.u32 4788187, %v570
    %v572 = vand.u32 2147483647, %v571
    %v574 = vcvt.s32.f32 %v567
    %v575 = vmul.f32 %v574, %v572
    %v576 = vxor.u32 %v575, 2147483648
    %v577 = vsel %vm456, %v576, %v575
    %v578 = vsub.s32 4, %v554
    %v579 = vsel %vm456, %v578, %v554
    %v580 = vsel %vm455, %v142, %v577
    %v581 = vsel %vm455, 0, %v579
    %v582 = vmul.f32 %v580, %v580
    %v583 = vmul.f32 %v582, -0.001358992
    %v584 = vadd.f32 %v583, 0.041655596
    %v585 = vmul.f32 %v582, %v584
    %v586 = vadd.f32 %v585, -0.4999988
    %v587 = vmul.f32 %v582, %v586
    %v588 = vadd.f32 1.0, %v587
    %v589 = vmul.f32 %v580, %v580
    %v590 = vmul.f32 %v589, -0.00019511016
    %v591 = vadd.f32 %v590, 0.008332121
    %v592 = vmul.f32 %v589, %v591
    %v593 = vadd.f32 %v592, -0.16666654
    %v594 = vmul.f32 %v589, %v593
    %v595 = vadd.f32 %v594, 1.0
    %v596 = vmul.f32 %v595, %v580
    %vm597 = vweird.f32 %v142
    %v598 = vadd.s32 %v581, 3
    %v599 = vand.u32 %v598, 3
    %vm600 = vcmp.lt.s32.totalorder %v599, 2
    %vm601 = vcmp.eq.s32.totalorder %v599, 0
    %v602 = vxor.u32 %v596, 2147483648
    %v603 = vsel %vm601, %v588, %v602
    %vm604 = vcmp.eq.s32.totalorder %v599, 2
    %v605 = vxor.u32 %v588, 2147483648
    %v606 = vsel %vm604, %v605, %v596
    %v607 = vsel %vm600, %v603, %v606
    %v608 = vsel %vm597, nan, %v607
    %v609 = vand.u32 2147483647, %v143
    %vm610 = vcmp.le.f32.partialorder %v609, 0.7853982
    %vm611 = vcmp.lt.s32.totalorder %v143, 0
    %v612 = vand.u32 %v143, 2139095040
    %v613 = vshrl.u32 %v612, 23
    %v614 = vsub.s32 %v613, 127
    %v615 = vand.u32 2147483647, %v143
    %v616 = vand.u32 %v615, 8388607
    %v617 = vor.u32 %v616, 8388608
    %v618 = vsub.s32 0, %v617
    %v619 = vadd.s32 %v614, 1
    %vm620 = vcmp.gt.s32.totalorder %v619, 0
    %v621 = vsel %vm620, %v619, 0
    %v622 = vshrl.u32 %v621, 5
    %v623 = vand.u32 %v621, 31
    %v624 = vsub.s32 32, %v623
    %v625 = vshrl.u32 683565275, %v624
    %v626 = vshll.u32 683565275, %v623
    %v627 = vshrl.u32 2475754826, %v624
    %v628 = vor.u32 %v626, %v627
    %v629 = vshll.u32 2475754826, %v623
    %v630 = vshrl.u32 2131351028, %v624
    %v631 = vor.u32 %v629, %v630
    %v632 = vshll.u32 2131351028, %v623
    %v633 = vshrl.u32 2102212464, %v624
    %v634 = vor.u32 %v632, %v633
    %v635 = vshll.u32 2102212464, %v623
    %v636 = vshrl.u32 920167782, %v624
    %v637 = vor.u32 %v635, %v636
    %v638 = vshll.u32 920167782, %v623
    %v639 = vshrl.u32 1326507024, %v624
    %v640 = vor.u32 %v638, %v639
    %vm641 = vcmp.lt.s32.totalorder %v622, 1
    %vm642 = vcmp.lt.s32.totalorder %v622, 2
    %vm643 = vcmp.lt.s32.totalorder %v622, 3
    %vm644 = vcmp.lt.s32.totalorder %v622, 4
    %v645 = vsel %vm641, %v625, %v628
    %v646 = vsel %vm644, %v634, 2102212464
    %v647 = vsel %vm643, %v631, %v646
    %v648 = vsel %vm642, %v645, %v647
    %v649 = vsel %vm641, %v628, %v631
    %v650 = vsel %vm644, %v637, 920167782
    %v651 = vsel %vm643, %v634, %v650
    %v652 = vsel %vm642, %v649, %v651
    %v653 = vsel %vm641, %v631, %v634
    %v654 = vsel %vm644, %v640, 1326507024
    %v655 = vsel %vm643, %v637, %v654
    %v656 = vsel %vm642, %v653, %v655
    %v657 = vshll.u32 %v617, 8
    %v658 = vand.u32 %v657, 65535
    %v659 = vshrl.u32 %v657, 16
    %v660 = vand.u32 %v656, 65535
    %v661 = vshrl.u32 %v656, 16
    %v662 = vmul.u32 %v658, %v660
    %v663 = vmul.u32 %v658, %v661
    %v664 = vmul.u32 %v659, %v660
    %v665 = vmul.u32 %v659, %v661
    %v666 = vshll.u32 %v663, 16
    %v667 = vshrl.u32 %v663, 16
    %v668 = vshll.u32 %v664, 16
    %v669 = vshrl.u32 %v664, 16
    %vm670 = vc.u32 %v662, %v666
    %v671 = vsel %vm670, 1, 0
    %v672 = vadd.s32 %v662, %v666
    %v673 = vadd.s32 %v665, %v671
    %vm674 = vc.u32 %v672, %v668
    %v675 = vsel %vm674, 1, 0
    %v676 = vadd.s32 %v672, %v668
    %v677 = vadd.s32 %v673, %v675
    %v678 = vadd.s32 %v677, %v667
    %v679 = vadd.s32 %v678, %v669
    %v680 = vand.u32 %v657, 65535
    %v681 = vshrl.u32 %v657, 16
    %v682 = vand.u32 %v652, 65535
    %v683 = vshrl.u32 %v652, 16
    %v684 = vmul.u32 %v680, %v682
    %v685 = vmul.u32 %v680, %v683
    %v686 = vmul.u32 %v681, %v682
    %v687 = vmul.u32 %v681, %v683
    %v688 = vshll.u32 %v685, 16
    %v689 = vshrl.u32 %v685, 16
    %v690 = vshll.u32 %v686, 16
    %v691 = vshrl.u32 %v686, 16
    %vm692 = vc.u32 %v684, %v688
    %v693 = vsel %vm692, 1, 0
    %v694 = vadd.s32 %v684, %v688
    %v695 = vadd.s32 %v687, %v693
    %vm696 = vc.u32 %v694, %v690
    %v697 = vsel %vm696, 1, 0
    %v698 = vadd.s32 %v694, %v690
    %v699 = vadd.s32 %v695, %v697
    %v700 = vadd.s32 %v699, %v689
    %v701 = vadd.s32 %v700, %v691
    %v702 = vmul.u32 %v657, %v648
    %v703 = vadd.s32 %v679, %v698
    %vm704 = vc.u32 %v679, %v698
    %v705 = vadd.s32 %v701, 1
    %v706 = vsel %vm704, %v705, %v701
    %v707 = vadd.s32 %v702, %v706
    %v708 = vadd.s32 %v707, 536870912
    %v709 = vshrl.u32 %v708, 30
    %v710 = vshll.u32 %v709, 30
    %v711 = vsub.s32 %v707, %v710
    %vm712 = vcmp.lt.s32.totalorder %v711, 0
    %v713 = vsub.s32 0, %v711
    %v714 = vsel %vm712, %v713, %v711
    %v715 = vclz %v714
    %v716 = vsub.s32 %v715, 2
    %vm717 = vcmp.gt.s32.totalorder 0, %v716
    %v718 = vsel %vm717, 0, %v716
    %v719 = vsub.s32 32, %v718
    %v720 = vshll.u32 %v711, %v718
    %v721 = vshrl.u32 %v703, %v719
    %v722 = vor.u32 %v720, %v721
    %v723 = vsub.s32 4294967266, %v718
    %v724 = vadd.s32 %v723, 127
    %v725 = vshll.u32 %v724, 23
    %v726 = vor.u32 4788187, %v725
    %v727 = vand.u32 2147483647, %v726
    %v729 = vcvt.s32.f32 %v722
    %v730 = vmul.f32 %v729, %v727
    %v731 = vxor.u32 %v730, 2147483648
    %v732 = vsel %vm611, %v731, %v730
    %v733 = vsub.s32 4, %v709
    %v734 = vsel %vm611, %v733, %v709
    %v735 = vsel %vm610, %v143, %v732
    %v736 = vsel %vm610, 0, %v734
    %v737 = vmul.f32 %v735, %v735
    %v738 = vmul.f32 %v737, -0.001358992
    %v739 = vadd.f32 %v738, 0.041655596
    %v740 = vmul.f32 %v737, %v739
    %v741 = vadd.f32 %v740, -0.4999988
    %v742 = vmul.f32 %v737, %v741
    %v743 = vadd.f32 1.0, %v742
    %v744 = vmul.f32 %v735, %v735
    %v745 = vmul.f32 %v744, -0.00019511016
    %v746 = vadd.f32 %v745, 0.008332121
    %v747 = vmul.f32 %v744, %v746
    %v748 = vadd.f32 %v747, -0.16666654
    %v749 = vmul.f32 %v744, %v748
    %v750 = vadd.f32 %v749, 1.0
    %v751 = vmul.f32 %v750, %v735
    %vm752 = vweird.f32 %v143
    %v753 = vadd.s32 %v736, 3
    %v754 = vand.u32 %v753, 3
    %vm755 = vcmp.lt.s32.totalorder %v754, 2
    %vm756 = vcmp.eq.s32.totalorder %v754, 0
    %v757 = vxor.u32 %v751, 2147483648
    %v758 = vsel %vm756, %v743, %v757
    %vm759 = vcmp.eq.s32.totalorder %v754, 2
    %v760 = vxor.u32 %v743, 2147483648
    %v761 = vsel %vm759, %v760, %v751
    %v762 = vsel %vm755, %v758, %v761
    %v763 = vsel %vm752, nan, %v762
    %v764 = vld [vmem:[%s3] sm:$0xff]
    %v765 = vld [vmem:[%s3 + $0x8] sm:$0xff]
    %v766 = vld [vmem:[%s3 + $0x10] sm:$0xff]
    %v767 = vld [vmem:[%s3 + $0x18] sm:$0xff]
    %v768 = vld [vmem:[%s4] sm:$0xff]
    %v769 = vld [vmem:[%s4 + $0x8] sm:$0xff]
    %v770 = vld [vmem:[%s4 + $0x10] sm:$0xff]
    %v771 = vld [vmem:[%s4 + $0x18] sm:$0xff]
    %v772 = vld [vmem:[%s5] sm:$0xff]
    %v773 = vld [vmem:[%s5 + $0x8] sm:$0xff]
    %v774 = vld [vmem:[%s5 + $0x10] sm:$0xff]
    %v775 = vld [vmem:[%s5 + $0x18] sm:$0xff]
    %777 = vset.pattern.permute.xlu0 0
    %778 = vperm.xlu0 %777, %v768
    %v779 = vpop.permute.xlu0 %778
    %782 = vset.pattern.permute.xlu0 0
    %783 = vperm.xlu0 %782, %v769
    %v784 = vpop.permute.xlu0 %783
    %787 = vset.pattern.permute.xlu0 0
    %788 = vperm.xlu0 %787, %v770
    %v789 = vpop.permute.xlu0 %788
    %792 = vset.pattern.permute.xlu0 0
    %793 = vperm.xlu0 %792, %v771
    %v794 = vpop.permute.xlu0 %793
    %v796 = vmul.f32 %v779, %v65
    %v797 = vmul.f32 %v784, %v65
    %v798 = vmul.f32 %v789, %v65
    %v799 = vmul.f32 %v794, %v65
    %800 = vset.pattern.permute.xlu0 1
    %801 = vperm.xlu0 %800, %v768
    %v802 = vpop.permute.xlu0 %801
    %804 = vset.pattern.permute.xlu0 1
    %805 = vperm.xlu0 %804, %v769
    %v806 = vpop.permute.xlu0 %805
    %808 = vset.pattern.permute.xlu0 1
    %809 = vperm.xlu0 %808, %v770
    %v810 = vpop.permute.xlu0 %809
    %812 = vset.pattern.permute.xlu0 1
    %813 = vperm.xlu0 %812, %v771
    %v814 = vpop.permute.xlu0 %813
    %v816 = vmul.f32 %v802, %v86
    %v817 = vmul.f32 %v806, %v86
    %v818 = vmul.f32 %v810, %v86
    %v819 = vmul.f32 %v814, %v86
    %v820 = vadd.f32 %v796, %v816
    %v821 = vadd.f32 %v797, %v817
    %v822 = vadd.f32 %v798, %v818
    %v823 = vadd.f32 %v799, %v819
    %824 = vset.pattern.permute.xlu0 2
    %825 = vperm.xlu0 %824, %v768
    %v826 = vpop.permute.xlu0 %825
    %828 = vset.pattern.permute.xlu0 2
    %829 = vperm.xlu0 %828, %v769
    %v830 = vpop.permute.xlu0 %829
    %832 = vset.pattern.permute.xlu0 2
    %833 = vperm.xlu0 %832, %v770
    %v834 = vpop.permute.xlu0 %833
    %836 = vset.pattern.permute.xlu0 2
    %837 = vperm.xlu0 %836, %v771
    %v838 = vpop.permute.xlu0 %837
    %v840 = vmul.f32 %v826, %v111
    %v841 = vmul.f32 %v830, %v111
    %v842 = vmul.f32 %v834, %v111
    %v843 = vmul.f32 %v838, %v111
    %v844 = vadd.f32 %v820, %v840
    %v845 = vadd.f32 %v821, %v841
    %v846 = vadd.f32 %v822, %v842
    %v847 = vadd.f32 %v823, %v843
    %vm848 = vcmask 261120
    %v850 = vsel %vm848, %v764, 0
    %v853 = vsel %vm848, %v765, 0
    %v856 = vsel %vm848, %v766, 0
    %v859 = vsel %vm848, %v767, 0
    %861 = vmatpush.msra.mxu0 0.0
    %862 = vmatpush.msra.mxu0 0.0
    %863 = vmatpush.msra.mxu0 0.0
    %864 = vmatpush.msra.mxu0 0.0
    %865 = vmatpush.msra.mxu0 0.0
    %866 = vmatpush.msra.mxu0 0.0
    %867 = vmatpush.msra.mxu0 0.0
    %868 = vmatpush.msra.mxu0 0.0
    %869 = vmatpush.msra.mxu0 0.0
    %870 = vmatpush.msra.mxu0 0.0
    %871 = vmatpush.msra.mxu0 0.0
    %872 = vmatpush.msra.mxu0 0.0
    %873 = vmatpush.msra.mxu0 %v763
    %874 = vmatpush.msra.mxu0 %v608
    %875 = vmatpush.msra.mxu0 %v453
    %876 = vmatpush.msra.mxu0 %v298
    %877 = vmatmul.f32.gmra.mxu0 %v850
    %v878 = vpop.f32.mrf.mxu0
    %v879 = vadd.f32 %v844, %v878
    %880 = vmatmul.f32.gmra.mxu0 %v853
    %v881 = vpop.f32.mrf.mxu0
    %v882 = vadd.f32 %v845, %v881
    %883 = vmatmul.f32.gmra.mxu0 %v856
    %v884 = vpop.f32.mrf.mxu0
    %v885 = vadd.f32 %v846, %v884
    %886 = vmatmul.f32.gmra.mxu0 %v859
    %v887 = vpop.f32.mrf.mxu0
    %v888 = vadd.f32 %v847, %v887
    %889 = vdwg.mxu0
    %891 = vset.pattern.permute.xlu0 0
    %892 = vperm.xlu0 %891, %v772
    %v893 = vpop.permute.xlu0 %892
    %896 = vset.pattern.permute.xlu0 0
    %897 = vperm.xlu0 %896, %v773
    %v898 = vpop.permute.xlu0 %897
    %901 = vset.pattern.permute.xlu0 0
    %902 = vperm.xlu0 %901, %v774
    %v903 = vpop.permute.xlu0 %902
    %906 = vset.pattern.permute.xlu0 0
    %907 = vperm.xlu0 %906, %v775
    %v908 = vpop.permute.xlu0 %907
    %v910 = vadd.f32 %v879, %v893
    %v911 = vadd.f32 %v882, %v898
    %v912 = vadd.f32 %v885, %v903
    %v913 = vadd.f32 %v888, %v908
    %v914 = vand.u32 2147483647, %v910
    %vm915 = vcmp.le.f32.partialorder %v914, 0.7853982
    %vm916 = vcmp.lt.s32.totalorder %v910, 0
    %v917 = vand.u32 %v910, 2139095040
    %v918 = vshrl.u32 %v917, 23
    %v919 = vsub.s32 %v918, 127
    %v920 = vand.u32 2147483647, %v910
    %v921 = vand.u32 %v920, 8388607
    %v922 = vor.u32 %v921, 8388608
    %v923 = vsub.s32 0, %v922
    %v924 = vadd.s32 %v919, 1
    %vm925 = vcmp.gt.s32.totalorder %v924, 0
    %v926 = vsel %vm925, %v924, 0
    %v927 = vshrl.u32 %v926, 5
    %v928 = vand.u32 %v926, 31
    %v929 = vsub.s32 32, %v928
    %v930 = vshrl.u32 683565275, %v929
    %v931 = vshll.u32 683565275, %v928
    %v932 = vshrl.u32 2475754826, %v929
    %v933 = vor.u32 %v931, %v932
    %v934 = vshll.u32 2475754826, %v928
    %v935 = vshrl.u32 2131351028, %v929
    %v936 = vor.u32 %v934, %v935
    %v937 = vshll.u32 2131351028, %v928
    %v938 = vshrl.u32 2102212464, %v929
    %v939 = vor.u32 %v937, %v938
    %v940 = vshll.u32 2102212464, %v928
    %v941 = vshrl.u32 920167782, %v929
    %v942 = vor.u32 %v940, %v941
    %v943 = vshll.u32 920167782, %v928
    %v944 = vshrl.u32 1326507024, %v929
    %v945 = vor.u32 %v943, %v944
    %vm946 = vcmp.lt.s32.totalorder %v927, 1
    %vm947 = vcmp.lt.s32.totalorder %v927, 2
    %vm948 = vcmp.lt.s32.totalorder %v927, 3
    %vm949 = vcmp.lt.s32.totalorder %v927, 4
    %v950 = vsel %vm946, %v930, %v933
    %v951 = vsel %vm949, %v939, 2102212464
    %v952 = vsel %vm948, %v936, %v951
    %v953 = vsel %vm947, %v950, %v952
    %v954 = vsel %vm946, %v933, %v936
    %v955 = vsel %vm949, %v942, 920167782
    %v956 = vsel %vm948, %v939, %v955
    %v957 = vsel %vm947, %v954, %v956
    %v958 = vsel %vm946, %v936, %v939
    %v959 = vsel %vm949, %v945, 1326507024
    %v960 = vsel %vm948, %v942, %v959
    %v961 = vsel %vm947, %v958, %v960
    %v962 = vshll.u32 %v922, 8
    %v963 = vand.u32 %v962, 65535
    %v964 = vshrl.u32 %v962, 16
    %v965 = vand.u32 %v961, 65535
    %v966 = vshrl.u32 %v961, 16
    %v967 = vmul.u32 %v963, %v965
    %v968 = vmul.u32 %v963, %v966
    %v969 = vmul.u32 %v964, %v965
    %v970 = vmul.u32 %v964, %v966
    %v971 = vshll.u32 %v968, 16
    %v972 = vshrl.u32 %v968, 16
    %v973 = vshll.u32 %v969, 16
    %v974 = vshrl.u32 %v969, 16
    %vm975 = vc.u32 %v967, %v971
    %v976 = vsel %vm975, 1, 0
    %v977 = vadd.s32 %v967, %v971
    %v978 = vadd.s32 %v970, %v976
    %vm979 = vc.u32 %v977, %v973
    %v980 = vsel %vm979, 1, 0
    %v981 = vadd.s32 %v977, %v973
    %v982 = vadd.s32 %v978, %v980
    %v983 = vadd.s32 %v982, %v972
    %v984 = vadd.s32 %v983, %v974
    %v985 = vand.u32 %v962, 65535
    %v986 = vshrl.u32 %v962, 16
    %v987 = vand.u32 %v957, 65535
    %v988 = vshrl.u32 %v957, 16
    %v989 = vmul.u32 %v985, %v987
    %v990 = vmul.u32 %v985, %v988
    %v991 = vmul.u32 %v986, %v987
    %v992 = vmul.u32 %v986, %v988
    %v993 = vshll.u32 %v990, 16
    %v994 = vshrl.u32 %v990, 16
    %v995 = vshll.u32 %v991, 16
    %v996 = vshrl.u32 %v991, 16
    %vm997 = vc.u32 %v989, %v993
    %v998 = vsel %vm997, 1, 0
    %v999 = vadd.s32 %v989, %v993
    %v1000 = vadd.s32 %v992, %v998
    %vm1001 = vc.u32 %v999, %v995
    %v1002 = vsel %vm1001, 1, 0
    %v1003 = vadd.s32 %v999, %v995
    %v1004 = vadd.s32 %v1000, %v1002
    %v1005 = vadd.s32 %v1004, %v994
    %v1006 = vadd.s32 %v1005, %v996
    %v1007 = vmul.u32 %v962, %v953
    %v1008 = vadd.s32 %v984, %v1003
    %vm1009 = vc.u32 %v984, %v1003
    %v1010 = vadd.s32 %v1006, 1
    %v1011 = vsel %vm1009, %v1010, %v1006
    %v1012 = vadd.s32 %v1007, %v1011
    %v1013 = vadd.s32 %v1012, 536870912
    %v1014 = vshrl.u32 %v1013, 30
    %v1015 = vshll.u32 %v1014, 30
    %v1016 = vsub.s32 %v1012, %v1015
    %vm1017 = vcmp.lt.s32.totalorder %v1016, 0
    %v1018 = vsub.s32 0, %v1016
    %v1019 = vsel %vm1017, %v1018, %v1016
    %v1020 = vclz %v1019
    %v1021 = vsub.s32 %v1020, 2
    %vm1022 = vcmp.gt.s32.totalorder 0, %v1021
    %v1023 = vsel %vm1022, 0, %v1021
    %v1024 = vsub.s32 32, %v1023
    %v1025 = vshll.u32 %v1016, %v1023
    %v1026 = vshrl.u32 %v1008, %v1024
    %v1027 = vor.u32 %v1025, %v1026
    %v1028 = vsub.s32 4294967266, %v1023
    %v1029 = vadd.s32 %v1028, 127
    %v1030 = vshll.u32 %v1029, 23
    %v1031 = vor.u32 4788187, %v1030
    %v1032 = vand.u32 2147483647, %v1031
    %v1034 = vcvt.s32.f32 %v1027
    %v1035 = vmul.f32 %v1034, %v1032
    %v1036 = vxor.u32 %v1035, 2147483648
    %v1037 = vsel %vm916, %v1036, %v1035
    %v1038 = vsub.s32 4, %v1014
    %v1039 = vsel %vm916, %v1038, %v1014
    %v1040 = vsel %vm915, %v910, %v1037
    %v1041 = vsel %vm915, 0, %v1039
    %v1042 = vmul.f32 %v1040, %v1040
    %v1043 = vmul.f32 %v1042, -0.001358992
    %v1044 = vadd.f32 %v1043, 0.041655596
    %v1045 = vmul.f32 %v1042, %v1044
    %v1046 = vadd.f32 %v1045, -0.4999988
    %v1047 = vmul.f32 %v1042, %v1046
    %v1048 = vadd.f32 1.0, %v1047
    %v1049 = vmul.f32 %v1040, %v1040
    %v1050 = vmul.f32 %v1049, -0.00019511016
    %v1051 = vadd.f32 %v1050, 0.008332121
    %v1052 = vmul.f32 %v1049, %v1051
    %v1053 = vadd.f32 %v1052, -0.16666654
    %v1054 = vmul.f32 %v1049, %v1053
    %v1055 = vadd.f32 %v1054, 1.0
    %v1056 = vmul.f32 %v1055, %v1040
    %vm1057 = vweird.f32 %v910
    %v1058 = vadd.s32 %v1041, 3
    %v1059 = vand.u32 %v1058, 3
    %vm1060 = vcmp.lt.s32.totalorder %v1059, 2
    %vm1061 = vcmp.eq.s32.totalorder %v1059, 0
    %v1062 = vxor.u32 %v1056, 2147483648
    %v1063 = vsel %vm1061, %v1048, %v1062
    %vm1064 = vcmp.eq.s32.totalorder %v1059, 2
    %v1065 = vxor.u32 %v1048, 2147483648
    %v1066 = vsel %vm1064, %v1065, %v1056
    %v1067 = vsel %vm1060, %v1063, %v1066
    %v1068 = vsel %vm1057, nan, %v1067
    %v1069 = vand.u32 2147483647, %v911
    %vm1070 = vcmp.le.f32.partialorder %v1069, 0.7853982
    %vm1071 = vcmp.lt.s32.totalorder %v911, 0
    %v1072 = vand.u32 %v911, 2139095040
    %v1073 = vshrl.u32 %v1072, 23
    %v1074 = vsub.s32 %v1073, 127
    %v1075 = vand.u32 2147483647, %v911
    %v1076 = vand.u32 %v1075, 8388607
    %v1077 = vor.u32 %v1076, 8388608
    %v1078 = vsub.s32 0, %v1077
    %v1079 = vadd.s32 %v1074, 1
    %vm1080 = vcmp.gt.s32.totalorder %v1079, 0
    %v1081 = vsel %vm1080, %v1079, 0
    %v1082 = vshrl.u32 %v1081, 5
    %v1083 = vand.u32 %v1081, 31
    %v1084 = vsub.s32 32, %v1083
    %v1085 = vshrl.u32 683565275, %v1084
    %v1086 = vshll.u32 683565275, %v1083
    %v1087 = vshrl.u32 2475754826, %v1084
    %v1088 = vor.u32 %v1086, %v1087
    %v1089 = vshll.u32 2475754826, %v1083
    %v1090 = vshrl.u32 2131351028, %v1084
    %v1091 = vor.u32 %v1089, %v1090
    %v1092 = vshll.u32 2131351028, %v1083
    %v1093 = vshrl.u32 2102212464, %v1084
    %v1094 = vor.u32 %v1092, %v1093
    %v1095 = vshll.u32 2102212464, %v1083
    %v1096 = vshrl.u32 920167782, %v1084
    %v1097 = vor.u32 %v1095, %v1096
    %v1098 = vshll.u32 920167782, %v1083
    %v1099 = vshrl.u32 1326507024, %v1084
    %v1100 = vor.u32 %v1098, %v1099
    %vm1101 = vcmp.lt.s32.totalorder %v1082, 1
    %vm1102 = vcmp.lt.s32.totalorder %v1082, 2
    %vm1103 = vcmp.lt.s32.totalorder %v1082, 3
    %vm1104 = vcmp.lt.s32.totalorder %v1082, 4
    %v1105 = vsel %vm1101, %v1085, %v1088
    %v1106 = vsel %vm1104, %v1094, 2102212464
    %v1107 = vsel %vm1103, %v1091, %v1106
    %v1108 = vsel %vm1102, %v1105, %v1107
    %v1109 = vsel %vm1101, %v1088, %v1091
    %v1110 = vsel %vm1104, %v1097, 920167782
    %v1111 = vsel %vm1103, %v1094, %v1110
    %v1112 = vsel %vm1102, %v1109, %v1111
    %v1113 = vsel %vm1101, %v1091, %v1094
    %v1114 = vsel %vm1104, %v1100, 1326507024
    %v1115 = vsel %vm1103, %v1097, %v1114
    %v1116 = vsel %vm1102, %v1113, %v1115
    %v1117 = vshll.u32 %v1077, 8
    %v1118 = vand.u32 %v1117, 65535
    %v1119 = vshrl.u32 %v1117, 16
    %v1120 = vand.u32 %v1116, 65535
    %v1121 = vshrl.u32 %v1116, 16
    %v1122 = vmul.u32 %v1118, %v1120
    %v1123 = vmul.u32 %v1118, %v1121
    %v1124 = vmul.u32 %v1119, %v1120
    %v1125 = vmul.u32 %v1119, %v1121
    %v1126 = vshll.u32 %v1123, 16
    %v1127 = vshrl.u32 %v1123, 16
    %v1128 = vshll.u32 %v1124, 16
    %v1129 = vshrl.u32 %v1124, 16
    %vm1130 = vc.u32 %v1122, %v1126
    %v1131 = vsel %vm1130, 1, 0
    %v1132 = vadd.s32 %v1122, %v1126
    %v1133 = vadd.s32 %v1125, %v1131
    %vm1134 = vc.u32 %v1132, %v1128
    %v1135 = vsel %vm1134, 1, 0
    %v1136 = vadd.s32 %v1132, %v1128
    %v1137 = vadd.s32 %v1133, %v1135
    %v1138 = vadd.s32 %v1137, %v1127
    %v1139 = vadd.s32 %v1138, %v1129
    %v1140 = vand.u32 %v1117, 65535
    %v1141 = vshrl.u32 %v1117, 16
    %v1142 = vand.u32 %v1112, 65535
    %v1143 = vshrl.u32 %v1112, 16
    %v1144 = vmul.u32 %v1140, %v1142
    %v1145 = vmul.u32 %v1140, %v1143
    %v1146 = vmul.u32 %v1141, %v1142
    %v1147 = vmul.u32 %v1141, %v1143
    %v1148 = vshll.u32 %v1145, 16
    %v1149 = vshrl.u32 %v1145, 16
    %v1150 = vshll.u32 %v1146, 16
    %v1151 = vshrl.u32 %v1146, 16
    %vm1152 = vc.u32 %v1144, %v1148
    %v1153 = vsel %vm1152, 1, 0
    %v1154 = vadd.s32 %v1144, %v1148
    %v1155 = vadd.s32 %v1147, %v1153
    %vm1156 = vc.u32 %v1154, %v1150
    %v1157 = vsel %vm1156, 1, 0
    %v1158 = vadd.s32 %v1154, %v1150
    %v1159 = vadd.s32 %v1155, %v1157
    %v1160 = vadd.s32 %v1159, %v1149
    %v1161 = vadd.s32 %v1160, %v1151
    %v1162 = vmul.u32 %v1117, %v1108
    %v1163 = vadd.s32 %v1139, %v1158
    %vm1164 = vc.u32 %v1139, %v1158
    %v1165 = vadd.s32 %v1161, 1
    %v1166 = vsel %vm1164, %v1165, %v1161
    %v1167 = vadd.s32 %v1162, %v1166
    %v1168 = vadd.s32 %v1167, 536870912
    %v1169 = vshrl.u32 %v1168, 30
    %v1170 = vshll.u32 %v1169, 30
    %v1171 = vsub.s32 %v1167, %v1170
    %vm1172 = vcmp.lt.s32.totalorder %v1171, 0
    %v1173 = vsub.s32 0, %v1171
    %v1174 = vsel %vm1172, %v1173, %v1171
    %v1175 = vclz %v1174
    %v1176 = vsub.s32 %v1175, 2
    %vm1177 = vcmp.gt.s32.totalorder 0, %v1176
    %v1178 = vsel %vm1177, 0, %v1176
    %v1179 = vsub.s32 32, %v1178
    %v1180 = vshll.u32 %v1171, %v1178
    %v1181 = vshrl.u32 %v1163, %v1179
    %v1182 = vor.u32 %v1180, %v1181
    %v1183 = vsub.s32 4294967266, %v1178
    %v1184 = vadd.s32 %v1183, 127
    %v1185 = vshll.u32 %v1184, 23
    %v1186 = vor.u32 4788187, %v1185
    %v1187 = vand.u32 2147483647, %v1186
    %v1189 = vcvt.s32.f32 %v1182
    %v1190 = vmul.f32 %v1189, %v1187
    %v1191 = vxor.u32 %v1190, 2147483648
    %v1192 = vsel %vm1071, %v1191, %v1190
    %v1193 = vsub.s32 4, %v1169
    %v1194 = vsel %vm1071, %v1193, %v1169
    %v1195 = vsel %vm1070, %v911, %v1192
    %v1196 = vsel %vm1070, 0, %v1194
    %v1197 = vmul.f32 %v1195, %v1195
    %v1198 = vmul.f32 %v1197, -0.001358992
    %v1199 = vadd.f32 %v1198, 0.041655596
    %v1200 = vmul.f32 %v1197, %v1199
    %v1201 = vadd.f32 %v1200, -0.4999988
    %v1202 = vmul.f32 %v1197, %v1201
    %v1203 = vadd.f32 1.0, %v1202
    %v1204 = vmul.f32 %v1195, %v1195
    %v1205 = vmul.f32 %v1204, -0.00019511016
    %v1206 = vadd.f32 %v1205, 0.008332121
    %v1207 = vmul.f32 %v1204, %v1206
    %v1208 = vadd.f32 %v1207, -0.16666654
    %v1209 = vmul.f32 %v1204, %v1208
    %v1210 = vadd.f32 %v1209, 1.0
    %v1211 = vmul.f32 %v1210, %v1195
    %vm1212 = vweird.f32 %v911
    %v1213 = vadd.s32 %v1196, 3
    %v1214 = vand.u32 %v1213, 3
    %vm1215 = vcmp.lt.s32.totalorder %v1214, 2
    %vm1216 = vcmp.eq.s32.totalorder %v1214, 0
    %v1217 = vxor.u32 %v1211, 2147483648
    %v1218 = vsel %vm1216, %v1203, %v1217
    %vm1219 = vcmp.eq.s32.totalorder %v1214, 2
    %v1220 = vxor.u32 %v1203, 2147483648
    %v1221 = vsel %vm1219, %v1220, %v1211
    %v1222 = vsel %vm1215, %v1218, %v1221
    %v1223 = vsel %vm1212, nan, %v1222
    %v1224 = vand.u32 2147483647, %v912
    %vm1225 = vcmp.le.f32.partialorder %v1224, 0.7853982
    %vm1226 = vcmp.lt.s32.totalorder %v912, 0
    %v1227 = vand.u32 %v912, 2139095040
    %v1228 = vshrl.u32 %v1227, 23
    %v1229 = vsub.s32 %v1228, 127
    %v1230 = vand.u32 2147483647, %v912
    %v1231 = vand.u32 %v1230, 8388607
    %v1232 = vor.u32 %v1231, 8388608
    %v1233 = vsub.s32 0, %v1232
    %v1234 = vadd.s32 %v1229, 1
    %vm1235 = vcmp.gt.s32.totalorder %v1234, 0
    %v1236 = vsel %vm1235, %v1234, 0
    %v1237 = vshrl.u32 %v1236, 5
    %v1238 = vand.u32 %v1236, 31
    %v1239 = vsub.s32 32, %v1238
    %v1240 = vshrl.u32 683565275, %v1239
    %v1241 = vshll.u32 683565275, %v1238
    %v1242 = vshrl.u32 2475754826, %v1239
    %v1243 = vor.u32 %v1241, %v1242
    %v1244 = vshll.u32 2475754826, %v1238
    %v1245 = vshrl.u32 2131351028, %v1239
    %v1246 = vor.u32 %v1244, %v1245
    %v1247 = vshll.u32 2131351028, %v1238
    %v1248 = vshrl.u32 2102212464, %v1239
    %v1249 = vor.u32 %v1247, %v1248
    %v1250 = vshll.u32 2102212464, %v1238
    %v1251 = vshrl.u32 920167782, %v1239
    %v1252 = vor.u32 %v1250, %v1251
    %v1253 = vshll.u32 920167782, %v1238
    %v1254 = vshrl.u32 1326507024, %v1239
    %v1255 = vor.u32 %v1253, %v1254
    %vm1256 = vcmp.lt.s32.totalorder %v1237, 1
    %vm1257 = vcmp.lt.s32.totalorder %v1237, 2
    %vm1258 = vcmp.lt.s32.totalorder %v1237, 3
    %vm1259 = vcmp.lt.s32.totalorder %v1237, 4
    %v1260 = vsel %vm1256, %v1240, %v1243
    %v1261 = vsel %vm1259, %v1249, 2102212464
    %v1262 = vsel %vm1258, %v1246, %v1261
    %v1263 = vsel %vm1257, %v1260, %v1262
    %v1264 = vsel %vm1256, %v1243, %v1246
    %v1265 = vsel %vm1259, %v1252, 920167782
    %v1266 = vsel %vm1258, %v1249, %v1265
    %v1267 = vsel %vm1257, %v1264, %v1266
    %v1268 = vsel %vm1256, %v1246, %v1249
    %v1269 = vsel %vm1259, %v1255, 1326507024
    %v1270 = vsel %vm1258, %v1252, %v1269
    %v1271 = vsel %vm1257, %v1268, %v1270
    %v1272 = vshll.u32 %v1232, 8
    %v1273 = vand.u32 %v1272, 65535
    %v1274 = vshrl.u32 %v1272, 16
    %v1275 = vand.u32 %v1271, 65535
    %v1276 = vshrl.u32 %v1271, 16
    %v1277 = vmul.u32 %v1273, %v1275
    %v1278 = vmul.u32 %v1273, %v1276
    %v1279 = vmul.u32 %v1274, %v1275
    %v1280 = vmul.u32 %v1274, %v1276
    %v1281 = vshll.u32 %v1278, 16
    %v1282 = vshrl.u32 %v1278, 16
    %v1283 = vshll.u32 %v1279, 16
    %v1284 = vshrl.u32 %v1279, 16
    %vm1285 = vc.u32 %v1277, %v1281
    %v1286 = vsel %vm1285, 1, 0
    %v1287 = vadd.s32 %v1277, %v1281
    %v1288 = vadd.s32 %v1280, %v1286
    %vm1289 = vc.u32 %v1287, %v1283
    %v1290 = vsel %vm1289, 1, 0
    %v1291 = vadd.s32 %v1287, %v1283
    %v1292 = vadd.s32 %v1288, %v1290
    %v1293 = vadd.s32 %v1292, %v1282
    %v1294 = vadd.s32 %v1293, %v1284
    %v1295 = vand.u32 %v1272, 65535
    %v1296 = vshrl.u32 %v1272, 16
    %v1297 = vand.u32 %v1267, 65535
    %v1298 = vshrl.u32 %v1267, 16
    %v1299 = vmul.u32 %v1295, %v1297
    %v1300 = vmul.u32 %v1295, %v1298
    %v1301 = vmul.u32 %v1296, %v1297
    %v1302 = vmul.u32 %v1296, %v1298
    %v1303 = vshll.u32 %v1300, 16
    %v1304 = vshrl.u32 %v1300, 16
    %v1305 = vshll.u32 %v1301, 16
    %v1306 = vshrl.u32 %v1301, 16
    %vm1307 = vc.u32 %v1299, %v1303
    %v1308 = vsel %vm1307, 1, 0
    %v1309 = vadd.s32 %v1299, %v1303
    %v1310 = vadd.s32 %v1302, %v1308
    %vm1311 = vc.u32 %v1309, %v1305
    %v1312 = vsel %vm1311, 1, 0
    %v1313 = vadd.s32 %v1309, %v1305
    %v1314 = vadd.s32 %v1310, %v1312
    %v1315 = vadd.s32 %v1314, %v1304
    %v1316 = vadd.s32 %v1315, %v1306
    %v1317 = vmul.u32 %v1272, %v1263
    %v1318 = vadd.s32 %v1294, %v1313
    %vm1319 = vc.u32 %v1294, %v1313
    %v1320 = vadd.s32 %v1316, 1
    %v1321 = vsel %vm1319, %v1320, %v1316
    %v1322 = vadd.s32 %v1317, %v1321
    %v1323 = vadd.s32 %v1322, 536870912
    %v1324 = vshrl.u32 %v1323, 30
    %v1325 = vshll.u32 %v1324, 30
    %v1326 = vsub.s32 %v1322, %v1325
    %vm1327 = vcmp.lt.s32.totalorder %v1326, 0
    %v1328 = vsub.s32 0, %v1326
    %v1329 = vsel %vm1327, %v1328, %v1326
    %v1330 = vclz %v1329
    %v1331 = vsub.s32 %v1330, 2
    %vm1332 = vcmp.gt.s32.totalorder 0, %v1331
    %v1333 = vsel %vm1332, 0, %v1331
    %v1334 = vsub.s32 32, %v1333
    %v1335 = vshll.u32 %v1326, %v1333
    %v1336 = vshrl.u32 %v1318, %v1334
    %v1337 = vor.u32 %v1335, %v1336
    %v1338 = vsub.s32 4294967266, %v1333
    %v1339 = vadd.s32 %v1338, 127
    %v1340 = vshll.u32 %v1339, 23
    %v1341 = vor.u32 4788187, %v1340
    %v1342 = vand.u32 2147483647, %v1341
    %v1344 = vcvt.s32.f32 %v1337
    %v1345 = vmul.f32 %v1344, %v1342
    %v1346 = vxor.u32 %v1345, 2147483648
    %v1347 = vsel %vm1226, %v1346, %v1345
    %v1348 = vsub.s32 4, %v1324
    %v1349 = vsel %vm1226, %v1348, %v1324
    %v1350 = vsel %vm1225, %v912, %v1347
    %v1351 = vsel %vm1225, 0, %v1349
    %v1352 = vmul.f32 %v1350, %v1350
    %v1353 = vmul.f32 %v1352, -0.001358992
    %v1354 = vadd.f32 %v1353, 0.041655596
    %v1355 = vmul.f32 %v1352, %v1354
    %v1356 = vadd.f32 %v1355, -0.4999988
    %v1357 = vmul.f32 %v1352, %v1356
    %v1358 = vadd.f32 1.0, %v1357
    %v1359 = vmul.f32 %v1350, %v1350
    %v1360 = vmul.f32 %v1359, -0.00019511016
    %v1361 = vadd.f32 %v1360, 0.008332121
    %v1362 = vmul.f32 %v1359, %v1361
    %v1363 = vadd.f32 %v1362, -0.16666654
    %v1364 = vmul.f32 %v1359, %v1363
    %v1365 = vadd.f32 %v1364, 1.0
    %v1366 = vmul.f32 %v1365, %v1350
    %vm1367 = vweird.f32 %v912
    %v1368 = vadd.s32 %v1351, 3
    %v1369 = vand.u32 %v1368, 3
    %vm1370 = vcmp.lt.s32.totalorder %v1369, 2
    %vm1371 = vcmp.eq.s32.totalorder %v1369, 0
    %v1372 = vxor.u32 %v1366, 2147483648
    %v1373 = vsel %vm1371, %v1358, %v1372
    %vm1374 = vcmp.eq.s32.totalorder %v1369, 2
    %v1375 = vxor.u32 %v1358, 2147483648
    %v1376 = vsel %vm1374, %v1375, %v1366
    %v1377 = vsel %vm1370, %v1373, %v1376
    %v1378 = vsel %vm1367, nan, %v1377
    %v1379 = vand.u32 2147483647, %v913
    %vm1380 = vcmp.le.f32.partialorder %v1379, 0.7853982
    %vm1381 = vcmp.lt.s32.totalorder %v913, 0
    %v1382 = vand.u32 %v913, 2139095040
    %v1383 = vshrl.u32 %v1382, 23
    %v1384 = vsub.s32 %v1383, 127
    %v1385 = vand.u32 2147483647, %v913
    %v1386 = vand.u32 %v1385, 8388607
    %v1387 = vor.u32 %v1386, 8388608
    %v1388 = vsub.s32 0, %v1387
    %v1389 = vadd.s32 %v1384, 1
    %vm1390 = vcmp.gt.s32.totalorder %v1389, 0
    %v1391 = vsel %vm1390, %v1389, 0
    %v1392 = vshrl.u32 %v1391, 5
    %v1393 = vand.u32 %v1391, 31
    %v1394 = vsub.s32 32, %v1393
    %v1395 = vshrl.u32 683565275, %v1394
    %v1396 = vshll.u32 683565275, %v1393
    %v1397 = vshrl.u32 2475754826, %v1394
    %v1398 = vor.u32 %v1396, %v1397
    %v1399 = vshll.u32 2475754826, %v1393
    %v1400 = vshrl.u32 2131351028, %v1394
    %v1401 = vor.u32 %v1399, %v1400
    %v1402 = vshll.u32 2131351028, %v1393
    %v1403 = vshrl.u32 2102212464, %v1394
    %v1404 = vor.u32 %v1402, %v1403
    %v1405 = vshll.u32 2102212464, %v1393
    %v1406 = vshrl.u32 920167782, %v1394
    %v1407 = vor.u32 %v1405, %v1406
    %v1408 = vshll.u32 920167782, %v1393
    %v1409 = vshrl.u32 1326507024, %v1394
    %v1410 = vor.u32 %v1408, %v1409
    %vm1411 = vcmp.lt.s32.totalorder %v1392, 1
    %vm1412 = vcmp.lt.s32.totalorder %v1392, 2
    %vm1413 = vcmp.lt.s32.totalorder %v1392, 3
    %vm1414 = vcmp.lt.s32.totalorder %v1392, 4
    %v1415 = vsel %vm1411, %v1395, %v1398
    %v1416 = vsel %vm1414, %v1404, 2102212464
    %v1417 = vsel %vm1413, %v1401, %v1416
    %v1418 = vsel %vm1412, %v1415, %v1417
    %v1419 = vsel %vm1411, %v1398, %v1401
    %v1420 = vsel %vm1414, %v1407, 920167782
    %v1421 = vsel %vm1413, %v1404, %v1420
    %v1422 = vsel %vm1412, %v1419, %v1421
    %v1423 = vsel %vm1411, %v1401, %v1404
    %v1424 = vsel %vm1414, %v1410, 1326507024
    %v1425 = vsel %vm1413, %v1407, %v1424
    %v1426 = vsel %vm1412, %v1423, %v1425
    %v1427 = vshll.u32 %v1387, 8
    %v1428 = vand.u32 %v1427, 65535
    %v1429 = vshrl.u32 %v1427, 16
    %v1430 = vand.u32 %v1426, 65535
    %v1431 = vshrl.u32 %v1426, 16
    %v1432 = vmul.u32 %v1428, %v1430
    %v1433 = vmul.u32 %v1428, %v1431
    %v1434 = vmul.u32 %v1429, %v1430
    %v1435 = vmul.u32 %v1429, %v1431
    %v1436 = vshll.u32 %v1433, 16
    %v1437 = vshrl.u32 %v1433, 16
    %v1438 = vshll.u32 %v1434, 16
    %v1439 = vshrl.u32 %v1434, 16
    %vm1440 = vc.u32 %v1432, %v1436
    %v1441 = vsel %vm1440, 1, 0
    %v1442 = vadd.s32 %v1432, %v1436
    %v1443 = vadd.s32 %v1435, %v1441
    %vm1444 = vc.u32 %v1442, %v1438
    %v1445 = vsel %vm1444, 1, 0
    %v1446 = vadd.s32 %v1442, %v1438
    %v1447 = vadd.s32 %v1443, %v1445
    %v1448 = vadd.s32 %v1447, %v1437
    %v1449 = vadd.s32 %v1448, %v1439
    %v1450 = vand.u32 %v1427, 65535
    %v1451 = vshrl.u32 %v1427, 16
    %v1452 = vand.u32 %v1422, 65535
    %v1453 = vshrl.u32 %v1422, 16
    %v1454 = vmul.u32 %v1450, %v1452
    %v1455 = vmul.u32 %v1450, %v1453
    %v1456 = vmul.u32 %v1451, %v1452
    %v1457 = vmul.u32 %v1451, %v1453
    %v1458 = vshll.u32 %v1455, 16
    %v1459 = vshrl.u32 %v1455, 16
    %v1460 = vshll.u32 %v1456, 16
    %v1461 = vshrl.u32 %v1456, 16
    %vm1462 = vc.u32 %v1454, %v1458
    %v1463 = vsel %vm1462, 1, 0
    %v1464 = vadd.s32 %v1454, %v1458
    %v1465 = vadd.s32 %v1457, %v1463
    %vm1466 = vc.u32 %v1464, %v1460
    %v1467 = vsel %vm1466, 1, 0
    %v1468 = vadd.s32 %v1464, %v1460
    %v1469 = vadd.s32 %v1465, %v1467
    %v1470 = vadd.s32 %v1469, %v1459
    %v1471 = vadd.s32 %v1470, %v1461
    %v1472 = vmul.u32 %v1427, %v1418
    %v1473 = vadd.s32 %v1449, %v1468
    %vm1474 = vc.u32 %v1449, %v1468
    %v1475 = vadd.s32 %v1471, 1
    %v1476 = vsel %vm1474, %v1475, %v1471
    %v1477 = vadd.s32 %v1472, %v1476
    %v1478 = vadd.s32 %v1477, 536870912
    %v1479 = vshrl.u32 %v1478, 30
    %v1480 = vshll.u32 %v1479, 30
    %v1481 = vsub.s32 %v1477, %v1480
    %vm1482 = vcmp.lt.s32.totalorder %v1481, 0
    %v1483 = vsub.s32 0, %v1481
    %v1484 = vsel %vm1482, %v1483, %v1481
    %v1485 = vclz %v1484
    %v1486 = vsub.s32 %v1485, 2
    %vm1487 = vcmp.gt.s32.totalorder 0, %v1486
    %v1488 = vsel %vm1487, 0, %v1486
    %v1489 = vsub.s32 32, %v1488
    %v1490 = vshll.u32 %v1481, %v1488
    %v1491 = vshrl.u32 %v1473, %v1489
    %v1492 = vor.u32 %v1490, %v1491
    %v1493 = vsub.s32 4294967266, %v1488
    %v1494 = vadd.s32 %v1493, 127
    %v1495 = vshll.u32 %v1494, 23
    %v1496 = vor.u32 4788187, %v1495
    %v1497 = vand.u32 2147483647, %v1496
    %v1499 = vcvt.s32.f32 %v1492
    %v1500 = vmul.f32 %v1499, %v1497
    %v1501 = vxor.u32 %v1500, 2147483648
    %v1502 = vsel %vm1381, %v1501, %v1500
    %v1503 = vsub.s32 4, %v1479
    %v1504 = vsel %vm1381, %v1503, %v1479
    %v1505 = vsel %vm1380, %v913, %v1502
    %v1506 = vsel %vm1380, 0, %v1504
    %v1507 = vmul.f32 %v1505, %v1505
    %v1508 = vmul.f32 %v1507, -0.001358992
    %v1509 = vadd.f32 %v1508, 0.041655596
    %v1510 = vmul.f32 %v1507, %v1509
    %v1511 = vadd.f32 %v1510, -0.4999988
    %v1512 = vmul.f32 %v1507, %v1511
    %v1513 = vadd.f32 1.0, %v1512
    %v1514 = vmul.f32 %v1505, %v1505
    %v1515 = vmul.f32 %v1514, -0.00019511016
    %v1516 = vadd.f32 %v1515, 0.008332121
    %v1517 = vmul.f32 %v1514, %v1516
    %v1518 = vadd.f32 %v1517, -0.16666654
    %v1519 = vmul.f32 %v1514, %v1518
    %v1520 = vadd.f32 %v1519, 1.0
    %v1521 = vmul.f32 %v1520, %v1505
    %vm1522 = vweird.f32 %v913
    %v1523 = vadd.s32 %v1506, 3
    %v1524 = vand.u32 %v1523, 3
    %vm1525 = vcmp.lt.s32.totalorder %v1524, 2
    %vm1526 = vcmp.eq.s32.totalorder %v1524, 0
    %v1527 = vxor.u32 %v1521, 2147483648
    %v1528 = vsel %vm1526, %v1513, %v1527
    %vm1529 = vcmp.eq.s32.totalorder %v1524, 2
    %v1530 = vxor.u32 %v1513, 2147483648
    %v1531 = vsel %vm1529, %v1530, %v1521
    %v1532 = vsel %vm1525, %v1528, %v1531
    %v1533 = vsel %vm1522, nan, %v1532
    %v1534 = vld [vmem:[%s6] sm:$0xff]
    %v1535 = vld [vmem:[%s6 + $0x8] sm:$0xff]
    %v1536 = vld [vmem:[%s6 + $0x10] sm:$0xff]
    %v1537 = vld [vmem:[%s6 + $0x18] sm:$0xff]
    %v1538 = vld [vmem:[%s7] sm:$0xff]
    %v1539 = vld [vmem:[%s7 + $0x8] sm:$0xff]
    %v1540 = vld [vmem:[%s7 + $0x10] sm:$0xff]
    %v1541 = vld [vmem:[%s7 + $0x18] sm:$0xff]
    %1543 = vset.pattern.permute.xlu0 0
    %1544 = vperm.xlu0 %1543, %v1538
    %v1545 = vpop.permute.xlu0 %1544
    %1548 = vset.pattern.permute.xlu0 0
    %1549 = vperm.xlu0 %1548, %v1539
    %v1550 = vpop.permute.xlu0 %1549
    %1553 = vset.pattern.permute.xlu0 0
    %1554 = vperm.xlu0 %1553, %v1540
    %v1555 = vpop.permute.xlu0 %1554
    %1558 = vset.pattern.permute.xlu0 0
    %1559 = vperm.xlu0 %1558, %v1541
    %v1560 = vpop.permute.xlu0 %1559
    %v1563 = vsel %vm848, %v1534, 0
    %v1566 = vsel %vm848, %v1535, 0
    %v1569 = vsel %vm848, %v1536, 0
    %v1572 = vsel %vm848, %v1537, 0
    %1574 = vmatpush.msra.mxu0 0.0
    %1575 = vmatpush.msra.mxu0 0.0
    %1576 = vmatpush.msra.mxu0 0.0
    %1577 = vmatpush.msra.mxu0 0.0
    %1578 = vmatpush.msra.mxu0 0.0
    %1579 = vmatpush.msra.mxu0 0.0
    %1580 = vmatpush.msra.mxu0 0.0
    %1581 = vmatpush.msra.mxu0 0.0
    %1582 = vmatpush.msra.mxu0 0.0
    %1583 = vmatpush.msra.mxu0 0.0
    %1584 = vmatpush.msra.mxu0 0.0
    %1585 = vmatpush.msra.mxu0 0.0
    %1586 = vmatpush.msra.mxu0 %v1533
    %1587 = vmatpush.msra.mxu0 %v1378
    %1588 = vmatpush.msra.mxu0 %v1223
    %1589 = vmatpush.msra.mxu0 %v1068
    %1590 = vmatmul.f32.gmra.mxu0 %v1563
    %v1591 = vpop.f32.mrf.mxu0
    %v1592 = vadd.f32 %v1545, %v1591
    %1593 = vmatmul.f32.gmra.mxu0 %v1566
    %v1594 = vpop.f32.mrf.mxu0
    %v1595 = vadd.f32 %v1550, %v1594
    %1596 = vmatmul.f32.gmra.mxu0 %v1569
    %v1597 = vpop.f32.mrf.mxu0
    %v1598 = vadd.f32 %v1555, %v1597
    %1599 = vmatmul.f32.gmra.mxu0 %v1572
    %v1600 = vpop.f32.mrf.mxu0
    %v1601 = vadd.f32 %v1560, %v1600
    %1602 = vdwg.mxu0
    %v1603 = vand.u32 2147483647, %v1592
    %vm1604 = vcmp.le.f32.partialorder %v1603, 0.7853982
    %vm1605 = vcmp.lt.s32.totalorder %v1592, 0
    %v1606 = vand.u32 %v1592, 2139095040
    %v1607 = vshrl.u32 %v1606, 23
    %v1608 = vsub.s32 %v1607, 127
    %v1609 = vand.u32 2147483647, %v1592
    %v1610 = vand.u32 %v1609, 8388607
    %v1611 = vor.u32 %v1610, 8388608
    %v1612 = vsub.s32 0, %v1611
    %v1613 = vadd.s32 %v1608, 1
    %vm1614 = vcmp.gt.s32.totalorder %v1613, 0
    %v1615 = vsel %vm1614, %v1613, 0
    %v1616 = vshrl.u32 %v1615, 5
    %v1617 = vand.u32 %v1615, 31
    %v1618 = vsub.s32 32, %v1617
    %v1619 = vshrl.u32 683565275, %v1618
    %v1620 = vshll.u32 683565275, %v1617
    %v1621 = vshrl.u32 2475754826, %v1618
    %v1622 = vor.u32 %v1620, %v1621
    %v1623 = vshll.u32 2475754826, %v1617
    %v1624 = vshrl.u32 2131351028, %v1618
    %v1625 = vor.u32 %v1623, %v1624
    %v1626 = vshll.u32 2131351028, %v1617
    %v1627 = vshrl.u32 2102212464, %v1618
    %v1628 = vor.u32 %v1626, %v1627
    %v1629 = vshll.u32 2102212464, %v1617
    %v1630 = vshrl.u32 920167782, %v1618
    %v1631 = vor.u32 %v1629, %v1630
    %v1632 = vshll.u32 920167782, %v1617
    %v1633 = vshrl.u32 1326507024, %v1618
    %v1634 = vor.u32 %v1632, %v1633
    %vm1635 = vcmp.lt.s32.totalorder %v1616, 1
    %vm1636 = vcmp.lt.s32.totalorder %v1616, 2
    %vm1637 = vcmp.lt.s32.totalorder %v1616, 3
    %vm1638 = vcmp.lt.s32.totalorder %v1616, 4
    %v1639 = vsel %vm1635, %v1619, %v1622
    %v1640 = vsel %vm1638, %v1628, 2102212464
    %v1641 = vsel %vm1637, %v1625, %v1640
    %v1642 = vsel %vm1636, %v1639, %v1641
    %v1643 = vsel %vm1635, %v1622, %v1625
    %v1644 = vsel %vm1638, %v1631, 920167782
    %v1645 = vsel %vm1637, %v1628, %v1644
    %v1646 = vsel %vm1636, %v1643, %v1645
    %v1647 = vsel %vm1635, %v1625, %v1628
    %v1648 = vsel %vm1638, %v1634, 1326507024
    %v1649 = vsel %vm1637, %v1631, %v1648
    %v1650 = vsel %vm1636, %v1647, %v1649
    %v1651 = vshll.u32 %v1611, 8
    %v1652 = vand.u32 %v1651, 65535
    %v1653 = vshrl.u32 %v1651, 16
    %v1654 = vand.u32 %v1650, 65535
    %v1655 = vshrl.u32 %v1650, 16
    %v1656 = vmul.u32 %v1652, %v1654
    %v1657 = vmul.u32 %v1652, %v1655
    %v1658 = vmul.u32 %v1653, %v1654
    %v1659 = vmul.u32 %v1653, %v1655
    %v1660 = vshll.u32 %v1657, 16
    %v1661 = vshrl.u32 %v1657, 16
    %v1662 = vshll.u32 %v1658, 16
    %v1663 = vshrl.u32 %v1658, 16
    %vm1664 = vc.u32 %v1656, %v1660
    %v1665 = vsel %vm1664, 1, 0
    %v1666 = vadd.s32 %v1656, %v1660
    %v1667 = vadd.s32 %v1659, %v1665
    %vm1668 = vc.u32 %v1666, %v1662
    %v1669 = vsel %vm1668, 1, 0
    %v1670 = vadd.s32 %v1666, %v1662
    %v1671 = vadd.s32 %v1667, %v1669
    %v1672 = vadd.s32 %v1671, %v1661
    %v1673 = vadd.s32 %v1672, %v1663
    %v1674 = vand.u32 %v1651, 65535
    %v1675 = vshrl.u32 %v1651, 16
    %v1676 = vand.u32 %v1646, 65535
    %v1677 = vshrl.u32 %v1646, 16
    %v1678 = vmul.u32 %v1674, %v1676
    %v1679 = vmul.u32 %v1674, %v1677
    %v1680 = vmul.u32 %v1675, %v1676
    %v1681 = vmul.u32 %v1675, %v1677
    %v1682 = vshll.u32 %v1679, 16
    %v1683 = vshrl.u32 %v1679, 16
    %v1684 = vshll.u32 %v1680, 16
    %v1685 = vshrl.u32 %v1680, 16
    %vm1686 = vc.u32 %v1678, %v1682
    %v1687 = vsel %vm1686, 1, 0
    %v1688 = vadd.s32 %v1678, %v1682
    %v1689 = vadd.s32 %v1681, %v1687
    %vm1690 = vc.u32 %v1688, %v1684
    %v1691 = vsel %vm1690, 1, 0
    %v1692 = vadd.s32 %v1688, %v1684
    %v1693 = vadd.s32 %v1689, %v1691
    %v1694 = vadd.s32 %v1693, %v1683
    %v1695 = vadd.s32 %v1694, %v1685
    %v1696 = vmul.u32 %v1651, %v1642
    %v1697 = vadd.s32 %v1673, %v1692
    %vm1698 = vc.u32 %v1673, %v1692
    %v1699 = vadd.s32 %v1695, 1
    %v1700 = vsel %vm1698, %v1699, %v1695
    %v1701 = vadd.s32 %v1696, %v1700
    %v1702 = vadd.s32 %v1701, 536870912
    %v1703 = vshrl.u32 %v1702, 30
    %v1704 = vshll.u32 %v1703, 30
    %v1705 = vsub.s32 %v1701, %v1704
    %vm1706 = vcmp.lt.s32.totalorder %v1705, 0
    %v1707 = vsub.s32 0, %v1705
    %v1708 = vsel %vm1706, %v1707, %v1705
    %v1709 = vclz %v1708
    %v1710 = vsub.s32 %v1709, 2
    %vm1711 = vcmp.gt.s32.totalorder 0, %v1710
    %v1712 = vsel %vm1711, 0, %v1710
    %v1713 = vsub.s32 32, %v1712
    %v1714 = vshll.u32 %v1705, %v1712
    %v1715 = vshrl.u32 %v1697, %v1713
    %v1716 = vor.u32 %v1714, %v1715
    %v1717 = vsub.s32 4294967266, %v1712
    %v1718 = vadd.s32 %v1717, 127
    %v1719 = vshll.u32 %v1718, 23
    %v1720 = vor.u32 4788187, %v1719
    %v1721 = vand.u32 2147483647, %v1720
    %v1723 = vcvt.s32.f32 %v1716
    %v1724 = vmul.f32 %v1723, %v1721
    %v1725 = vxor.u32 %v1724, 2147483648
    %v1726 = vsel %vm1605, %v1725, %v1724
    %v1727 = vsub.s32 4, %v1703
    %v1728 = vsel %vm1605, %v1727, %v1703
    %v1729 = vsel %vm1604, %v1592, %v1726
    %v1730 = vsel %vm1604, 0, %v1728
    %v1731 = vmul.f32 %v1729, %v1729
    %v1732 = vmul.f32 %v1731, -0.001358992
    %v1733 = vadd.f32 %v1732, 0.041655596
    %v1734 = vmul.f32 %v1731, %v1733
    %v1735 = vadd.f32 %v1734, -0.4999988
    %v1736 = vmul.f32 %v1731, %v1735
    %v1737 = vadd.f32 1.0, %v1736
    %v1738 = vmul.f32 %v1729, %v1729
    %v1739 = vmul.f32 %v1738, -0.00019511016
    %v1740 = vadd.f32 %v1739, 0.008332121
    %v1741 = vmul.f32 %v1738, %v1740
    %v1742 = vadd.f32 %v1741, -0.16666654
    %v1743 = vmul.f32 %v1738, %v1742
    %v1744 = vadd.f32 %v1743, 1.0
    %v1745 = vmul.f32 %v1744, %v1729
    %vm1746 = vweird.f32 %v1592
    %v1747 = vadd.s32 %v1730, 3
    %v1748 = vand.u32 %v1747, 3
    %vm1749 = vcmp.lt.s32.totalorder %v1748, 2
    %vm1750 = vcmp.eq.s32.totalorder %v1748, 0
    %v1751 = vxor.u32 %v1745, 2147483648
    %v1752 = vsel %vm1750, %v1737, %v1751
    %vm1753 = vcmp.eq.s32.totalorder %v1748, 2
    %v1754 = vxor.u32 %v1737, 2147483648
    %v1755 = vsel %vm1753, %v1754, %v1745
    %v1756 = vsel %vm1749, %v1752, %v1755
    %v1757 = vsel %vm1746, nan, %v1756
    %v1758 = vand.u32 2147483647, %v1595
    %vm1759 = vcmp.le.f32.partialorder %v1758, 0.7853982
    %vm1760 = vcmp.lt.s32.totalorder %v1595, 0
    %v1761 = vand.u32 %v1595, 2139095040
    %v1762 = vshrl.u32 %v1761, 23
    %v1763 = vsub.s32 %v1762, 127
    %v1764 = vand.u32 2147483647, %v1595
    %v1765 = vand.u32 %v1764, 8388607
    %v1766 = vor.u32 %v1765, 8388608
    %v1767 = vsub.s32 0, %v1766
    %v1768 = vadd.s32 %v1763, 1
    %vm1769 = vcmp.gt.s32.totalorder %v1768, 0
    %v1770 = vsel %vm1769, %v1768, 0
    %v1771 = vshrl.u32 %v1770, 5
    %v1772 = vand.u32 %v1770, 31
    %v1773 = vsub.s32 32, %v1772
    %v1774 = vshrl.u32 683565275, %v1773
    %v1775 = vshll.u32 683565275, %v1772
    %v1776 = vshrl.u32 2475754826, %v1773
    %v1777 = vor.u32 %v1775, %v1776
    %v1778 = vshll.u32 2475754826, %v1772
    %v1779 = vshrl.u32 2131351028, %v1773
    %v1780 = vor.u32 %v1778, %v1779
    %v1781 = vshll.u32 2131351028, %v1772
    %v1782 = vshrl.u32 2102212464, %v1773
    %v1783 = vor.u32 %v1781, %v1782
    %v1784 = vshll.u32 2102212464, %v1772
    %v1785 = vshrl.u32 920167782, %v1773
    %v1786 = vor.u32 %v1784, %v1785
    %v1787 = vshll.u32 920167782, %v1772
    %v1788 = vshrl.u32 1326507024, %v1773
    %v1789 = vor.u32 %v1787, %v1788
    %vm1790 = vcmp.lt.s32.totalorder %v1771, 1
    %vm1791 = vcmp.lt.s32.totalorder %v1771, 2
    %vm1792 = vcmp.lt.s32.totalorder %v1771, 3
    %vm1793 = vcmp.lt.s32.totalorder %v1771, 4
    %v1794 = vsel %vm1790, %v1774, %v1777
    %v1795 = vsel %vm1793, %v1783, 2102212464
    %v1796 = vsel %vm1792, %v1780, %v1795
    %v1797 = vsel %vm1791, %v1794, %v1796
    %v1798 = vsel %vm1790, %v1777, %v1780
    %v1799 = vsel %vm1793, %v1786, 920167782
    %v1800 = vsel %vm1792, %v1783, %v1799
    %v1801 = vsel %vm1791, %v1798, %v1800
    %v1802 = vsel %vm1790, %v1780, %v1783
    %v1803 = vsel %vm1793, %v1789, 1326507024
    %v1804 = vsel %vm1792, %v1786, %v1803
    %v1805 = vsel %vm1791, %v1802, %v1804
    %v1806 = vshll.u32 %v1766, 8
    %v1807 = vand.u32 %v1806, 65535
    %v1808 = vshrl.u32 %v1806, 16
    %v1809 = vand.u32 %v1805, 65535
    %v1810 = vshrl.u32 %v1805, 16
    %v1811 = vmul.u32 %v1807, %v1809
    %v1812 = vmul.u32 %v1807, %v1810
    %v1813 = vmul.u32 %v1808, %v1809
    %v1814 = vmul.u32 %v1808, %v1810
    %v1815 = vshll.u32 %v1812, 16
    %v1816 = vshrl.u32 %v1812, 16
    %v1817 = vshll.u32 %v1813, 16
    %v1818 = vshrl.u32 %v1813, 16
    %vm1819 = vc.u32 %v1811, %v1815
    %v1820 = vsel %vm1819, 1, 0
    %v1821 = vadd.s32 %v1811, %v1815
    %v1822 = vadd.s32 %v1814, %v1820
    %vm1823 = vc.u32 %v1821, %v1817
    %v1824 = vsel %vm1823, 1, 0
    %v1825 = vadd.s32 %v1821, %v1817
    %v1826 = vadd.s32 %v1822, %v1824
    %v1827 = vadd.s32 %v1826, %v1816
    %v1828 = vadd.s32 %v1827, %v1818
    %v1829 = vand.u32 %v1806, 65535
    %v1830 = vshrl.u32 %v1806, 16
    %v1831 = vand.u32 %v1801, 65535
    %v1832 = vshrl.u32 %v1801, 16
    %v1833 = vmul.u32 %v1829, %v1831
    %v1834 = vmul.u32 %v1829, %v1832
    %v1835 = vmul.u32 %v1830, %v1831
    %v1836 = vmul.u32 %v1830, %v1832
    %v1837 = vshll.u32 %v1834, 16
    %v1838 = vshrl.u32 %v1834, 16
    %v1839 = vshll.u32 %v1835, 16
    %v1840 = vshrl.u32 %v1835, 16
    %vm1841 = vc.u32 %v1833, %v1837
    %v1842 = vsel %vm1841, 1, 0
    %v1843 = vadd.s32 %v1833, %v1837
    %v1844 = vadd.s32 %v1836, %v1842
    %vm1845 = vc.u32 %v1843, %v1839
    %v1846 = vsel %vm1845, 1, 0
    %v1847 = vadd.s32 %v1843, %v1839
    %v1848 = vadd.s32 %v1844, %v1846
    %v1849 = vadd.s32 %v1848, %v1838
    %v1850 = vadd.s32 %v1849, %v1840
    %v1851 = vmul.u32 %v1806, %v1797
    %v1852 = vadd.s32 %v1828, %v1847
    %vm1853 = vc.u32 %v1828, %v1847
    %v1854 = vadd.s32 %v1850, 1
    %v1855 = vsel %vm1853, %v1854, %v1850
    %v1856 = vadd.s32 %v1851, %v1855
    %v1857 = vadd.s32 %v1856, 536870912
    %v1858 = vshrl.u32 %v1857, 30
    %v1859 = vshll.u32 %v1858, 30
    %v1860 = vsub.s32 %v1856, %v1859
    %vm1861 = vcmp.lt.s32.totalorder %v1860, 0
    %v1862 = vsub.s32 0, %v1860
    %v1863 = vsel %vm1861, %v1862, %v1860
    %v1864 = vclz %v1863
    %v1865 = vsub.s32 %v1864, 2
    %vm1866 = vcmp.gt.s32.totalorder 0, %v1865
    %v1867 = vsel %vm1866, 0, %v1865
    %v1868 = vsub.s32 32, %v1867
    %v1869 = vshll.u32 %v1860, %v1867
    %v1870 = vshrl.u32 %v1852, %v1868
    %v1871 = vor.u32 %v1869, %v1870
    %v1872 = vsub.s32 4294967266, %v1867
    %v1873 = vadd.s32 %v1872, 127
    %v1874 = vshll.u32 %v1873, 23
    %v1875 = vor.u32 4788187, %v1874
    %v1876 = vand.u32 2147483647, %v1875
    %v1878 = vcvt.s32.f32 %v1871
    %v1879 = vmul.f32 %v1878, %v1876
    %v1880 = vxor.u32 %v1879, 2147483648
    %v1881 = vsel %vm1760, %v1880, %v1879
    %v1882 = vsub.s32 4, %v1858
    %v1883 = vsel %vm1760, %v1882, %v1858
    %v1884 = vsel %vm1759, %v1595, %v1881
    %v1885 = vsel %vm1759, 0, %v1883
    %v1886 = vmul.f32 %v1884, %v1884
    %v1887 = vmul.f32 %v1886, -0.001358992
    %v1888 = vadd.f32 %v1887, 0.041655596
    %v1889 = vmul.f32 %v1886, %v1888
    %v1890 = vadd.f32 %v1889, -0.4999988
    %v1891 = vmul.f32 %v1886, %v1890
    %v1892 = vadd.f32 1.0, %v1891
    %v1893 = vmul.f32 %v1884, %v1884
    %v1894 = vmul.f32 %v1893, -0.00019511016
    %v1895 = vadd.f32 %v1894, 0.008332121
    %v1896 = vmul.f32 %v1893, %v1895
    %v1897 = vadd.f32 %v1896, -0.16666654
    %v1898 = vmul.f32 %v1893, %v1897
    %v1899 = vadd.f32 %v1898, 1.0
    %v1900 = vmul.f32 %v1899, %v1884
    %vm1901 = vweird.f32 %v1595
    %v1902 = vadd.s32 %v1885, 3
    %v1903 = vand.u32 %v1902, 3
    %vm1904 = vcmp.lt.s32.totalorder %v1903, 2
    %vm1905 = vcmp.eq.s32.totalorder %v1903, 0
    %v1906 = vxor.u32 %v1900, 2147483648
    %v1907 = vsel %vm1905, %v1892, %v1906
    %vm1908 = vcmp.eq.s32.totalorder %v1903, 2
    %v1909 = vxor.u32 %v1892, 2147483648
    %v1910 = vsel %vm1908, %v1909, %v1900
    %v1911 = vsel %vm1904, %v1907, %v1910
    %v1912 = vsel %vm1901, nan, %v1911
    %v1913 = vand.u32 2147483647, %v1598
    %vm1914 = vcmp.le.f32.partialorder %v1913, 0.7853982
    %vm1915 = vcmp.lt.s32.totalorder %v1598, 0
    %v1916 = vand.u32 %v1598, 2139095040
    %v1917 = vshrl.u32 %v1916, 23
    %v1918 = vsub.s32 %v1917, 127
    %v1919 = vand.u32 2147483647, %v1598
    %v1920 = vand.u32 %v1919, 8388607
    %v1921 = vor.u32 %v1920, 8388608
    %v1922 = vsub.s32 0, %v1921
    %v1923 = vadd.s32 %v1918, 1
    %vm1924 = vcmp.gt.s32.totalorder %v1923, 0
    %v1925 = vsel %vm1924, %v1923, 0
    %v1926 = vshrl.u32 %v1925, 5
    %v1927 = vand.u32 %v1925, 31
    %v1928 = vsub.s32 32, %v1927
    %v1929 = vshrl.u32 683565275, %v1928
    %v1930 = vshll.u32 683565275, %v1927
    %v1931 = vshrl.u32 2475754826, %v1928
    %v1932 = vor.u32 %v1930, %v1931
    %v1933 = vshll.u32 2475754826, %v1927
    %v1934 = vshrl.u32 2131351028, %v1928
    %v1935 = vor.u32 %v1933, %v1934
    %v1936 = vshll.u32 2131351028, %v1927
    %v1937 = vshrl.u32 2102212464, %v1928
    %v1938 = vor.u32 %v1936, %v1937
    %v1939 = vshll.u32 2102212464, %v1927
    %v1940 = vshrl.u32 920167782, %v1928
    %v1941 = vor.u32 %v1939, %v1940
    %v1942 = vshll.u32 920167782, %v1927
    %v1943 = vshrl.u32 1326507024, %v1928
    %v1944 = vor.u32 %v1942, %v1943
    %vm1945 = vcmp.lt.s32.totalorder %v1926, 1
    %vm1946 = vcmp.lt.s32.totalorder %v1926, 2
    %vm1947 = vcmp.lt.s32.totalorder %v1926, 3
    %vm1948 = vcmp.lt.s32.totalorder %v1926, 4
    %v1949 = vsel %vm1945, %v1929, %v1932
    %v1950 = vsel %vm1948, %v1938, 2102212464
    %v1951 = vsel %vm1947, %v1935, %v1950
    %v1952 = vsel %vm1946, %v1949, %v1951
    %v1953 = vsel %vm1945, %v1932, %v1935
    %v1954 = vsel %vm1948, %v1941, 920167782
    %v1955 = vsel %vm1947, %v1938, %v1954
    %v1956 = vsel %vm1946, %v1953, %v1955
    %v1957 = vsel %vm1945, %v1935, %v1938
    %v1958 = vsel %vm1948, %v1944, 1326507024
    %v1959 = vsel %vm1947, %v1941, %v1958
    %v1960 = vsel %vm1946, %v1957, %v1959
    %v1961 = vshll.u32 %v1921, 8
    %v1962 = vand.u32 %v1961, 65535
    %v1963 = vshrl.u32 %v1961, 16
    %v1964 = vand.u32 %v1960, 65535
    %v1965 = vshrl.u32 %v1960, 16
    %v1966 = vmul.u32 %v1962, %v1964
    %v1967 = vmul.u32 %v1962, %v1965
    %v1968 = vmul.u32 %v1963, %v1964
    %v1969 = vmul.u32 %v1963, %v1965
    %v1970 = vshll.u32 %v1967, 16
    %v1971 = vshrl.u32 %v1967, 16
    %v1972 = vshll.u32 %v1968, 16
    %v1973 = vshrl.u32 %v1968, 16
    %vm1974 = vc.u32 %v1966, %v1970
    %v1975 = vsel %vm1974, 1, 0
    %v1976 = vadd.s32 %v1966, %v1970
    %v1977 = vadd.s32 %v1969, %v1975
    %vm1978 = vc.u32 %v1976, %v1972
    %v1979 = vsel %vm1978, 1, 0
    %v1980 = vadd.s32 %v1976, %v1972
    %v1981 = vadd.s32 %v1977, %v1979
    %v1982 = vadd.s32 %v1981, %v1971
    %v1983 = vadd.s32 %v1982, %v1973
    %v1984 = vand.u32 %v1961, 65535
    %v1985 = vshrl.u32 %v1961, 16
    %v1986 = vand.u32 %v1956, 65535
    %v1987 = vshrl.u32 %v1956, 16
    %v1988 = vmul.u32 %v1984, %v1986
    %v1989 = vmul.u32 %v1984, %v1987
    %v1990 = vmul.u32 %v1985, %v1986
    %v1991 = vmul.u32 %v1985, %v1987
    %v1992 = vshll.u32 %v1989, 16
    %v1993 = vshrl.u32 %v1989, 16
    %v1994 = vshll.u32 %v1990, 16
    %v1995 = vshrl.u32 %v1990, 16
    %vm1996 = vc.u32 %v1988, %v1992
    %v1997 = vsel %vm1996, 1, 0
    %v1998 = vadd.s32 %v1988, %v1992
    %v1999 = vadd.s32 %v1991, %v1997
    %vm2000 = vc.u32 %v1998, %v1994
    %v2001 = vsel %vm2000, 1, 0
    %v2002 = vadd.s32 %v1998, %v1994
    %v2003 = vadd.s32 %v1999, %v2001
    %v2004 = vadd.s32 %v2003, %v1993
    %v2005 = vadd.s32 %v2004, %v1995
    %v2006 = vmul.u32 %v1961, %v1952
    %v2007 = vadd.s32 %v1983, %v2002
    %vm2008 = vc.u32 %v1983, %v2002
    %v2009 = vadd.s32 %v2005, 1
    %v2010 = vsel %vm2008, %v2009, %v2005
    %v2011 = vadd.s32 %v2006, %v2010
    %v2012 = vadd.s32 %v2011, 536870912
    %v2013 = vshrl.u32 %v2012, 30
    %v2014 = vshll.u32 %v2013, 30
    %v2015 = vsub.s32 %v2011, %v2014
    %vm2016 = vcmp.lt.s32.totalorder %v2015, 0
    %v2017 = vsub.s32 0, %v2015
    %v2018 = vsel %vm2016, %v2017, %v2015
    %v2019 = vclz %v2018
    %v2020 = vsub.s32 %v2019, 2
    %vm2021 = vcmp.gt.s32.totalorder 0, %v2020
    %v2022 = vsel %vm2021, 0, %v2020
    %v2023 = vsub.s32 32, %v2022
    %v2024 = vshll.u32 %v2015, %v2022
    %v2025 = vshrl.u32 %v2007, %v2023
    %v2026 = vor.u32 %v2024, %v2025
    %v2027 = vsub.s32 4294967266, %v2022
    %v2028 = vadd.s32 %v2027, 127
    %v2029 = vshll.u32 %v2028, 23
    %v2030 = vor.u32 4788187, %v2029
    %v2031 = vand.u32 2147483647, %v2030
    %v2033 = vcvt.s32.f32 %v2026
    %v2034 = vmul.f32 %v2033, %v2031
    %v2035 = vxor.u32 %v2034, 2147483648
    %v2036 = vsel %vm1915, %v2035, %v2034
    %v2037 = vsub.s32 4, %v2013
    %v2038 = vsel %vm1915, %v2037, %v2013
    %v2039 = vsel %vm1914, %v1598, %v2036
    %v2040 = vsel %vm1914, 0, %v2038
    %v2041 = vmul.f32 %v2039, %v2039
    %v2042 = vmul.f32 %v2041, -0.001358992
    %v2043 = vadd.f32 %v2042, 0.041655596
    %v2044 = vmul.f32 %v2041, %v2043
    %v2045 = vadd.f32 %v2044, -0.4999988
    %v2046 = vmul.f32 %v2041, %v2045
    %v2047 = vadd.f32 1.0, %v2046
    %v2048 = vmul.f32 %v2039, %v2039
    %v2049 = vmul.f32 %v2048, -0.00019511016
    %v2050 = vadd.f32 %v2049, 0.008332121
    %v2051 = vmul.f32 %v2048, %v2050
    %v2052 = vadd.f32 %v2051, -0.16666654
    %v2053 = vmul.f32 %v2048, %v2052
    %v2054 = vadd.f32 %v2053, 1.0
    %v2055 = vmul.f32 %v2054, %v2039
    %vm2056 = vweird.f32 %v1598
    %v2057 = vadd.s32 %v2040, 3
    %v2058 = vand.u32 %v2057, 3
    %vm2059 = vcmp.lt.s32.totalorder %v2058, 2
    %vm2060 = vcmp.eq.s32.totalorder %v2058, 0
    %v2061 = vxor.u32 %v2055, 2147483648
    %v2062 = vsel %vm2060, %v2047, %v2061
    %vm2063 = vcmp.eq.s32.totalorder %v2058, 2
    %v2064 = vxor.u32 %v2047, 2147483648
    %v2065 = vsel %vm2063, %v2064, %v2055
    %v2066 = vsel %vm2059, %v2062, %v2065
    %v2067 = vsel %vm2056, nan, %v2066
    %v2068 = vand.u32 2147483647, %v1601
    %vm2069 = vcmp.le.f32.partialorder %v2068, 0.7853982
    %vm2070 = vcmp.lt.s32.totalorder %v1601, 0
    %v2071 = vand.u32 %v1601, 2139095040
    %v2072 = vshrl.u32 %v2071, 23
    %v2073 = vsub.s32 %v2072, 127
    %v2074 = vand.u32 2147483647, %v1601
    %v2075 = vand.u32 %v2074, 8388607
    %v2076 = vor.u32 %v2075, 8388608
    %v2077 = vsub.s32 0, %v2076
    %v2078 = vadd.s32 %v2073, 1
    %vm2079 = vcmp.gt.s32.totalorder %v2078, 0
    %v2080 = vsel %vm2079, %v2078, 0
    %v2081 = vshrl.u32 %v2080, 5
    %v2082 = vand.u32 %v2080, 31
    %v2083 = vsub.s32 32, %v2082
    %v2084 = vshrl.u32 683565275, %v2083
    %v2085 = vshll.u32 683565275, %v2082
    %v2086 = vshrl.u32 2475754826, %v2083
    %v2087 = vor.u32 %v2085, %v2086
    %v2088 = vshll.u32 2475754826, %v2082
    %v2089 = vshrl.u32 2131351028, %v2083
    %v2090 = vor.u32 %v2088, %v2089
    %v2091 = vshll.u32 2131351028, %v2082
    %v2092 = vshrl.u32 2102212464, %v2083
    %v2093 = vor.u32 %v2091, %v2092
    %v2094 = vshll.u32 2102212464, %v2082
    %v2095 = vshrl.u32 920167782, %v2083
    %v2096 = vor.u32 %v2094, %v2095
    %v2097 = vshll.u32 920167782, %v2082
    %v2098 = vshrl.u32 1326507024, %v2083
    %v2099 = vor.u32 %v2097, %v2098
    %vm2100 = vcmp.lt.s32.totalorder %v2081, 1
    %vm2101 = vcmp.lt.s32.totalorder %v2081, 2
    %vm2102 = vcmp.lt.s32.totalorder %v2081, 3
    %vm2103 = vcmp.lt.s32.totalorder %v2081, 4
    %v2104 = vsel %vm2100, %v2084, %v2087
    %v2105 = vsel %vm2103, %v2093, 2102212464
    %v2106 = vsel %vm2102, %v2090, %v2105
    %v2107 = vsel %vm2101, %v2104, %v2106
    %v2108 = vsel %vm2100, %v2087, %v2090
    %v2109 = vsel %vm2103, %v2096, 920167782
    %v2110 = vsel %vm2102, %v2093, %v2109
    %v2111 = vsel %vm2101, %v2108, %v2110
    %v2112 = vsel %vm2100, %v2090, %v2093
    %v2113 = vsel %vm2103, %v2099, 1326507024
    %v2114 = vsel %vm2102, %v2096, %v2113
    %v2115 = vsel %vm2101, %v2112, %v2114
    %v2116 = vshll.u32 %v2076, 8
    %v2117 = vand.u32 %v2116, 65535
    %v2118 = vshrl.u32 %v2116, 16
    %v2119 = vand.u32 %v2115, 65535
    %v2120 = vshrl.u32 %v2115, 16
    %v2121 = vmul.u32 %v2117, %v2119
    %v2122 = vmul.u32 %v2117, %v2120
    %v2123 = vmul.u32 %v2118, %v2119
    %v2124 = vmul.u32 %v2118, %v2120
    %v2125 = vshll.u32 %v2122, 16
    %v2126 = vshrl.u32 %v2122, 16
    %v2127 = vshll.u32 %v2123, 16
    %v2128 = vshrl.u32 %v2123, 16
    %vm2129 = vc.u32 %v2121, %v2125
    %v2130 = vsel %vm2129, 1, 0
    %v2131 = vadd.s32 %v2121, %v2125
    %v2132 = vadd.s32 %v2124, %v2130
    %vm2133 = vc.u32 %v2131, %v2127
    %v2134 = vsel %vm2133, 1, 0
    %v2135 = vadd.s32 %v2131, %v2127
    %v2136 = vadd.s32 %v2132, %v2134
    %v2137 = vadd.s32 %v2136, %v2126
    %v2138 = vadd.s32 %v2137, %v2128
    %v2139 = vand.u32 %v2116, 65535
    %v2140 = vshrl.u32 %v2116, 16
    %v2141 = vand.u32 %v2111, 65535
    %v2142 = vshrl.u32 %v2111, 16
    %v2143 = vmul.u32 %v2139, %v2141
    %v2144 = vmul.u32 %v2139, %v2142
    %v2145 = vmul.u32 %v2140, %v2141
    %v2146 = vmul.u32 %v2140, %v2142
    %v2147 = vshll.u32 %v2144, 16
    %v2148 = vshrl.u32 %v2144, 16
    %v2149 = vshll.u32 %v2145, 16
    %v2150 = vshrl.u32 %v2145, 16
    %vm2151 = vc.u32 %v2143, %v2147
    %v2152 = vsel %vm2151, 1, 0
    %v2153 = vadd.s32 %v2143, %v2147
    %v2154 = vadd.s32 %v2146, %v2152
    %vm2155 = vc.u32 %v2153, %v2149
    %v2156 = vsel %vm2155, 1, 0
    %v2157 = vadd.s32 %v2153, %v2149
    %v2158 = vadd.s32 %v2154, %v2156
    %v2159 = vadd.s32 %v2158, %v2148
    %v2160 = vadd.s32 %v2159, %v2150
    %v2161 = vmul.u32 %v2116, %v2107
    %v2162 = vadd.s32 %v2138, %v2157
    %vm2163 = vc.u32 %v2138, %v2157
    %v2164 = vadd.s32 %v2160, 1
    %v2165 = vsel %vm2163, %v2164, %v2160
    %v2166 = vadd.s32 %v2161, %v2165
    %v2167 = vadd.s32 %v2166, 536870912
    %v2168 = vshrl.u32 %v2167, 30
    %v2169 = vshll.u32 %v2168, 30
    %v2170 = vsub.s32 %v2166, %v2169
    %vm2171 = vcmp.lt.s32.totalorder %v2170, 0
    %v2172 = vsub.s32 0, %v2170
    %v2173 = vsel %vm2171, %v2172, %v2170
    %v2174 = vclz %v2173
    %v2175 = vsub.s32 %v2174, 2
    %vm2176 = vcmp.gt.s32.totalorder 0, %v2175
    %v2177 = vsel %vm2176, 0, %v2175
    %v2178 = vsub.s32 32, %v2177
    %v2179 = vshll.u32 %v2170, %v2177
    %v2180 = vshrl.u32 %v2162, %v2178
    %v2181 = vor.u32 %v2179, %v2180
    %v2182 = vsub.s32 4294967266, %v2177
    %v2183 = vadd.s32 %v2182, 127
    %v2184 = vshll.u32 %v2183, 23
    %v2185 = vor.u32 4788187, %v2184
    %v2186 = vand.u32 2147483647, %v2185
    %v2188 = vcvt.s32.f32 %v2181
    %v2189 = vmul.f32 %v2188, %v2186
    %v2190 = vxor.u32 %v2189, 2147483648
    %v2191 = vsel %vm2070, %v2190, %v2189
    %v2192 = vsub.s32 4, %v2168
    %v2193 = vsel %vm2070, %v2192, %v2168
    %v2194 = vsel %vm2069, %v1601, %v2191
    %v2195 = vsel %vm2069, 0, %v2193
    %v2196 = vmul.f32 %v2194, %v2194
    %v2197 = vmul.f32 %v2196, -0.001358992
    %v2198 = vadd.f32 %v2197, 0.041655596
    %v2199 = vmul.f32 %v2196, %v2198
    %v2200 = vadd.f32 %v2199, -0.4999988
    %v2201 = vmul.f32 %v2196, %v2200
    %v2202 = vadd.f32 1.0, %v2201
    %v2203 = vmul.f32 %v2194, %v2194
    %v2204 = vmul.f32 %v2203, -0.00019511016
    %v2205 = vadd.f32 %v2204, 0.008332121
    %v2206 = vmul.f32 %v2203, %v2205
    %v2207 = vadd.f32 %v2206, -0.16666654
    %v2208 = vmul.f32 %v2203, %v2207
    %v2209 = vadd.f32 %v2208, 1.0
    %v2210 = vmul.f32 %v2209, %v2194
    %vm2211 = vweird.f32 %v1601
    %v2212 = vadd.s32 %v2195, 3
    %v2213 = vand.u32 %v2212, 3
    %vm2214 = vcmp.lt.s32.totalorder %v2213, 2
    %vm2215 = vcmp.eq.s32.totalorder %v2213, 0
    %v2216 = vxor.u32 %v2210, 2147483648
    %v2217 = vsel %vm2215, %v2202, %v2216
    %vm2218 = vcmp.eq.s32.totalorder %v2213, 2
    %v2219 = vxor.u32 %v2202, 2147483648
    %v2220 = vsel %vm2218, %v2219, %v2210
    %v2221 = vsel %vm2214, %v2217, %v2220
    %v2222 = vsel %vm2211, nan, %v2221
    %v2223 = vld [vmem:[%s8] sm:$0xf]
    %v2224 = vld [vmem:[%s9] sm:$0xf]
    %2226 = vset.pattern.permute.xlu0 0
    %2227 = vperm.xlu0 %2226, %v2224
    %v2228 = vpop.permute.xlu0 %2227
    %v2231 = vsel %vm848, %v2223, 0
    %2233 = vmatpush.msra.mxu0 0.0
    %2234 = vmatpush.msra.mxu0 0.0
    %2235 = vmatpush.msra.mxu0 0.0
    %2236 = vmatpush.msra.mxu0 0.0
    %2237 = vmatpush.msra.mxu0 0.0
    %2238 = vmatpush.msra.mxu0 0.0
    %2239 = vmatpush.msra.mxu0 0.0
    %2240 = vmatpush.msra.mxu0 0.0
    %2241 = vmatpush.msra.mxu0 0.0
    %2242 = vmatpush.msra.mxu0 0.0
    %2243 = vmatpush.msra.mxu0 0.0
    %2244 = vmatpush.msra.mxu0 0.0
    %2245 = vmatpush.msra.mxu0 %v2222
    %2246 = vmatpush.msra.mxu0 %v2067
    %2247 = vmatpush.msra.mxu0 %v1912
    %2248 = vmatpush.msra.mxu0 %v1757
    %2249 = vmatmul.f32.gmra.mxu0 %v2231
    %v2250 = vpop.f32.mrf.mxu0
    %v2251 = vadd.f32 %v2228, %v2250
    %2252 = vdwg.mxu0
    %2253 = vst [vmem:[#allocation2] sm:$0xf] %v2251
    // Predicated region
    $region42: #{tpu_custom_call.1} parent=1 // pred_check
      _
    $region43: #{tpu_custom_call.1} parent=1 // pred_check_branch
      %2255 = sbr.rel (0) target = $region45
    $region44: #{tpu_custom_call.1} parent=1 // pred_region
      %2257 = vsyncadd [#allocation3], 0
      %s2259 = sshll.u32 [#allocation2], 4
      %s2260 = int_to_ptr.vmem [resolvable:$true] %s2259
      %s2261 = sshll.u32 %s10, 4
      %s2262 = int_to_ptr.hbm [resolvable:$true] %s2261
      %2264 = dma.vmem_to_hbm [thread:$0]  %s2260, 64, %s2262, [#allocation3]
    $region45: #{tpu_custom_call.1} parent=1 // pred_fallthru
      _
    // Predicated region
    $region46: #{tpu_custom_call.1} parent=1 // pred_check
      _
    $region47: #{tpu_custom_call.1} parent=1 // pred_check_branch
      %2266 = sbr.rel (0) target = $region49
    $region48: #{tpu_custom_call.1} parent=1 // pred_region
      %2268 = dma.done [#allocation3], 64
    $region49: #{tpu_custom_call.1} parent=1 // pred_fallthru
      _
    %2269 = vsyncpa [#allocation3], 1

</llo_original>
